<compile_context>
chip_gen: v6e
topology: v6e:2x2x1
jax: 0.10.0
libtpu: 0.0.40
codegen_flags: <defaults>
</compile_context>

<pallas_src>
import functools

import jax
import jax.numpy as jnp
from jax.experimental import pallas as pl
from jax.experimental.pallas import tpu as pltpu

INPUT_DIM = 2
OUTPUT_DIM = 1
HIDDEN_LAYERS = 5
LAYER_SIZE = 20

PAD = 128       # sublane-padded hidden feature dimension (20 -> 128)
IN_PAD = 8      # sublane-padded input feature dimension  (2 -> 8)
OUT_PAD = 8     # sublane-padded output feature dimension (1 -> 8)
TB_MAX = 2048   # max batch tile (lane axis, multiple of 128)


def _round_up(a, b):
    return ((a + b - 1) // b) * b


def _swish(v):
    # Exact swish via one tanh:  x * sigmoid(x) = 0.5 * x * (tanh(x/2) + 1).
    # Single EUP transcendental per element; VALU sees one mul + one add + one mul.
    return 0.5 * v * (jnp.tanh(0.5 * v) + 1.0)


def ffn_kernel(x_ref, w_in_ref, b_in_ref, w_h_ref, b_h_ref,
               w_out_ref, b_out_ref, o_ref):
    # x_ref:     (IN_PAD, TB)  bf16        o_ref:     (OUT_PAD, TB) f32
    # w_in_ref:  (PAD, IN_PAD) bf16        b_in_ref:  (PAD, 1)      f32
    # w_h_ref:   (L, PAD, PAD) bf16        b_h_ref:   (L, PAD, 1)   f32
    # w_out_ref: (OUT_PAD, PAD) bf16       b_out_ref: (OUT_PAD, 1)  f32
    x = x_ref[...]                                              # bf16

    # input layer + swish:  h = swish(W_in @ x + b_in)          (PAD, TB) f32
    h = jnp.dot(w_in_ref[...], x, preferred_element_type=jnp.float32)
    h = _swish(h + b_in_ref[...])

    # hidden layers (static unroll; HIDDEN_LAYERS is small & fixed)
    for l in range(HIDDEN_LAYERS):
        h = jnp.dot(w_h_ref[l], h.astype(jnp.bfloat16),
                    preferred_element_type=jnp.float32)
        h = _swish(h + b_h_ref[l])

    # output layer (no activation) — lane-dense (OUT_PAD, TB) store
    o = jnp.dot(w_out_ref[...], h.astype(jnp.bfloat16),
                preferred_element_type=jnp.float32)
    o_ref[...] = (o + b_out_ref[...]).astype(o_ref.dtype)


@jax.jit
def ffn_forward(x, params):
    """x: (N, INPUT_DIM) float32. Returns (N, OUTPUT_DIM) float32."""
    w_in, b_in, w_h, b_h, w_out, b_out = params
    n = x.shape[0]

    # Pick the batch (lane) tile: as large as possible, multiple of 128,
    # but keep >= 2 grid steps when the batch allows it (v7x megacore).
    n_pad = _round_up(n, 128)
    tb = min(TB_MAX, n_pad)
    if n_pad > 128 and n_pad // tb < 2:
        tb = _round_up(n_pad // 2, 128)
    n_pad = _round_up(n, tb)

    # Layout plumbing only: (n, 2) f32 -> (IN_PAD, n_pad) bf16, batch on lanes.
    x_t = jnp.pad(x.astype(jnp.bfloat16).T,
                  ((0, IN_PAD - INPUT_DIM), (0, n_pad - n)))

    grid = (n_pad // tb,)
    out_p = pl.pallas_call(
        ffn_kernel,
        out_shape=jax.ShapeDtypeStruct((OUT_PAD, n_pad), jnp.float32),
        grid_spec=pltpu.PrefetchScalarGridSpec(
            num_scalar_prefetch=0,
            grid=grid,
            in_specs=[
                pl.BlockSpec((IN_PAD, tb), lambda i: (0, i)),                    # x tile
                pl.BlockSpec((PAD, IN_PAD), lambda i: (0, 0)),                   # W_in
                pl.BlockSpec((PAD, 1), lambda i: (0, 0)),                        # b_in
                pl.BlockSpec((HIDDEN_LAYERS, PAD, PAD), lambda i: (0, 0, 0)),    # W_h stack
                pl.BlockSpec((HIDDEN_LAYERS, PAD, 1), lambda i: (0, 0, 0)),      # b_h stack
                pl.BlockSpec((OUT_PAD, PAD), lambda i: (0, 0)),                  # W_out
                pl.BlockSpec((OUT_PAD, 1), lambda i: (0, 0)),                    # b_out
            ],
            out_specs=pl.BlockSpec((OUT_PAD, tb), lambda i: (0, i)),
        ),
        compiler_params=pltpu.CompilerParams(
            dimension_semantics=("parallel",)),
    )(x_t, w_in, b_in, w_h, b_h, w_out, b_out)

    # (OUT_PAD, n_pad) -> (n, OUTPUT_DIM)
    return out_p[:OUTPUT_DIM, :n].T


def init_params(key):
    """Xavier-normal weights / zero biases, zero-padded, PyTorch (out, in) layout.

    Weights are stored in bf16 (single-pass MXU operands); biases in f32.
    Padded rows/cols are exactly zero so padded sublanes stay zero.
    """
    def xavier(key, fan_in, fan_out, shape):
        std = (2.0 / (fan_in + fan_out)) ** 0.5
        return std * jax.random.normal(key, shape, jnp.float32)

    keys = jax.random.split(key, 2 + HIDDEN_LAYERS)

    w_in = jnp.zeros((PAD, IN_PAD), jnp.bfloat16).at[:LAYER_SIZE, :INPUT_DIM].set(
        xavier(keys[0], INPUT_DIM, LAYER_SIZE,
               (LAYER_SIZE, INPUT_DIM)).astype(jnp.bfloat16))
    b_in = jnp.zeros((PAD, 1), jnp.float32)

    w_h_list = []
    for l in range(HIDDEN_LAYERS):
        w = jnp.zeros((PAD, PAD), jnp.bfloat16).at[:LAYER_SIZE, :LAYER_SIZE].set(
            xavier(keys[1 + l], LAYER_SIZE, LAYER_SIZE,
                   (LAYER_SIZE, LAYER_SIZE)).astype(jnp.bfloat16))
        w_h_list.append(w)
    w_h = jnp.stack(w_h_list, axis=0)
    b_h = jnp.zeros((HIDDEN_LAYERS, PAD, 1), jnp.float32)

    w_out = jnp.zeros((OUT_PAD, PAD), jnp.bfloat16).at[:OUTPUT_DIM, :LAYER_SIZE].set(
        xavier(keys[1 + HIDDEN_LAYERS], LAYER_SIZE, OUTPUT_DIM,
               (OUTPUT_DIM, LAYER_SIZE)).astype(jnp.bfloat16))
    b_out = jnp.zeros((OUT_PAD, 1), jnp.float32)

    return w_in, b_in, w_h, b_h, w_out, b_out


def ffn_reference(x, params):
    """Pure-JAX f32 reference of the same forward pass (y = x @ W.T + b)."""
    w_in, b_in, w_h, b_h, w_out, b_out = params

    def swish(v):
        return v * jax.nn.sigmoid(v)

    w_in_f = w_in[:LAYER_SIZE, :INPUT_DIM].astype(jnp.float32)
    h = swish(x @ w_in_f.T + b_in[:LAYER_SIZE, 0])
    for l in range(HIDDEN_LAYERS):
        w_f = w_h[l, :LAYER_SIZE, :LAYER_SIZE].astype(jnp.float32)
        h = swish(h @ w_f.T + b_h[l, :LAYER_SIZE, 0])
    w_out_f = w_out[:OUTPUT_DIM, :LAYER_SIZE].astype(jnp.float32)
    return h @ w_out_f.T + b_out[:OUTPUT_DIM, 0]


if __name__ == "__main__":
    key = jax.random.PRNGKey(0)
    k_x, k_p = jax.random.split(key)

    batch = 300   # exercises batch padding and a 2-step grid
    x = jax.random.normal(k_x, (batch, INPUT_DIM), jnp.float32)
    params = init_params(k_p)

    out = ffn_forward(x, params)
    out = jax.block_until_ready(out)

    ref = ffn_reference(x, params)
    assert out.shape == (batch, OUTPUT_DIM)
    # Tolerance accounts for bf16 matmul operands (f32 accumulation) chained
    # across 7 layers; the swish itself is exact (tanh form, no approx recip).
    assert jnp.allclose(out, ref, atol=2e-2, rtol=2e-2), (
        f"max abs err = {jnp.max(jnp.abs(out - ref))}")

    print("KERNEL_OK")
</pallas_src>

<mosaic_0001>
module attributes {stable_mosaic.version = 11 : i64} {
  func.func @ffn_kernel(%arg0: i32, %arg1: memref<8x256xbf16, #tpu.memory_space<vmem>>, %arg2: memref<128x8xbf16, #tpu.memory_space<vmem>>, %arg3: memref<128x1xf32, #tpu.memory_space<vmem>>, %arg4: memref<5x128x128xbf16, #tpu.memory_space<vmem>>, %arg5: memref<5x128x1xf32, #tpu.memory_space<vmem>>, %arg6: memref<8x128xbf16, #tpu.memory_space<vmem>>, %arg7: memref<8x1xf32, #tpu.memory_space<vmem>>, %arg8: memref<8x256xf32, #tpu.memory_space<vmem>>) attributes {dimension_semantics = [#tpu.dimension_semantics<parallel>], iteration_bounds = array<i64: 2>, scalar_prefetch = 0 : i64, scratch_operands = 0 : i64, tpu.core_type = #tpu.core_type<tc>, window_params = [{transform_indices = @transform_0, window_bounds = array<i64: 8, 256>}, {pipeline_mode = #tpu.pipeline_mode<synchronous>, transform_indices = @transform_1, window_bounds = array<i64: 128, 8>}, {pipeline_mode = #tpu.pipeline_mode<synchronous>, transform_indices = @transform_2, window_bounds = array<i64: 128, 1>}, {pipeline_mode = #tpu.pipeline_mode<synchronous>, transform_indices = @transform_3, window_bounds = array<i64: 5, 128, 128>}, {pipeline_mode = #tpu.pipeline_mode<synchronous>, transform_indices = @transform_4, window_bounds = array<i64: 5, 128, 1>}, {pipeline_mode = #tpu.pipeline_mode<synchronous>, transform_indices = @transform_5, window_bounds = array<i64: 8, 128>}, {pipeline_mode = #tpu.pipeline_mode<synchronous>, transform_indices = @transform_6, window_bounds = array<i64: 8, 1>}, {transform_indices = @transform_7, window_bounds = array<i64: 8, 256>}]} {
    %c0 = arith.constant 0 : index
    %c0_0 = arith.constant 0 : index
    %0 = vector.load %arg1[%c0, %c0_0] : memref<8x256xbf16, #tpu.memory_space<vmem>>, vector<8x256xbf16>
    %c0_1 = arith.constant 0 : index
    %c0_2 = arith.constant 0 : index
    %1 = vector.load %arg2[%c0_1, %c0_2] : memref<128x8xbf16, #tpu.memory_space<vmem>>, vector<128x8xbf16>
    %cst = arith.constant dense<0.000000e+00> : vector<128x256xf32>
    %2 = tpu.matmul %1, %0, %cst {dimension_numbers = #tpu.dot_dimension_numbers<[1], [0], [0], [1], [0, 0, 1, 1], [], []>} : vector<128x8xbf16>, vector<8x256xbf16>, vector<128x256xf32> -> vector<128x256xf32>
    %c0_3 = arith.constant 0 : index
    %c0_4 = arith.constant 0 : index
    %3 = vector.load %arg3[%c0_3, %c0_4] : memref<128x1xf32, #tpu.memory_space<vmem>>, vector<128x1xf32>
    %4 = vector.broadcast %3 : vector<128x1xf32> to vector<128x256xf32>
    %5 = arith.addf %2, %4 : vector<128x256xf32>
    %cst_5 = arith.constant 5.000000e-01 : f32
    %6 = vector.broadcast %cst_5 : f32 to vector<128x256xf32>
    %7 = arith.mulf %6, %5 : vector<128x256xf32>
    %cst_6 = arith.constant 5.000000e-01 : f32
    %8 = vector.broadcast %cst_6 : f32 to vector<128x256xf32>
    %9 = arith.mulf %8, %5 : vector<128x256xf32>
    %10 = math.tanh %9 : vector<128x256xf32>
    %cst_7 = arith.constant 1.000000e+00 : f32
    %11 = vector.broadcast %cst_7 : f32 to vector<128x256xf32>
    %12 = arith.addf %10, %11 : vector<128x256xf32>
    %13 = arith.mulf %7, %12 : vector<128x256xf32>
    %c0_8 = arith.constant 0 : index
    %c0_9 = arith.constant 0 : index
    %c0_10 = arith.constant 0 : index
    %14 = vector.load %arg4[%c0_8, %c0_9, %c0_10] : memref<5x128x128xbf16, #tpu.memory_space<vmem>>, vector<1x128x128xbf16>
    %15 = vector.shape_cast %14 : vector<1x128x128xbf16> to vector<128x128xbf16>
    %16 = arith.truncf %13 : vector<128x256xf32> to vector<128x256xbf16>
    %cst_11 = arith.constant dense<0.000000e+00> : vector<128x256xf32>
    %17 = tpu.matmul %15, %16, %cst_11 {dimension_numbers = #tpu.dot_dimension_numbers<[1], [0], [0], [1], [0, 0, 1, 1], [], []>} : vector<128x128xbf16>, vector<128x256xbf16>, vector<128x256xf32> -> vector<128x256xf32>
    %c0_12 = arith.constant 0 : index
    %c0_13 = arith.constant 0 : index
    %c0_14 = arith.constant 0 : index
    %18 = vector.load %arg5[%c0_12, %c0_13, %c0_14] : memref<5x128x1xf32, #tpu.memory_space<vmem>>, vector<1x128x1xf32>
    %19 = vector.shape_cast %18 : vector<1x128x1xf32> to vector<128x1xf32>
    %20 = vector.broadcast %19 : vector<128x1xf32> to vector<128x256xf32>
    %21 = arith.addf %17, %20 : vector<128x256xf32>
    %cst_15 = arith.constant 5.000000e-01 : f32
    %22 = vector.broadcast %cst_15 : f32 to vector<128x256xf32>
    %23 = arith.mulf %22, %21 : vector<128x256xf32>
    %cst_16 = arith.constant 5.000000e-01 : f32
    %24 = vector.broadcast %cst_16 : f32 to vector<128x256xf32>
    %25 = arith.mulf %24, %21 : vector<128x256xf32>
    %26 = math.tanh %25 : vector<128x256xf32>
    %cst_17 = arith.constant 1.000000e+00 : f32
    %27 = vector.broadcast %cst_17 : f32 to vector<128x256xf32>
    %28 = arith.addf %26, %27 : vector<128x256xf32>
    %29 = arith.mulf %23, %28 : vector<128x256xf32>
    %c1 = arith.constant 1 : index
    %c0_18 = arith.constant 0 : index
    %c0_19 = arith.constant 0 : index
    %30 = vector.load %arg4[%c1, %c0_18, %c0_19] : memref<5x128x128xbf16, #tpu.memory_space<vmem>>, vector<1x128x128xbf16>
    %31 = vector.shape_cast %30 : vector<1x128x128xbf16> to vector<128x128xbf16>
    %32 = arith.truncf %29 : vector<128x256xf32> to vector<128x256xbf16>
    %cst_20 = arith.constant dense<0.000000e+00> : vector<128x256xf32>
    %33 = tpu.matmul %31, %32, %cst_20 {dimension_numbers = #tpu.dot_dimension_numbers<[1], [0], [0], [1], [0, 0, 1, 1], [], []>} : vector<128x128xbf16>, vector<128x256xbf16>, vector<128x256xf32> -> vector<128x256xf32>
    %c1_21 = arith.constant 1 : index
    %c0_22 = arith.constant 0 : index
    %c0_23 = arith.constant 0 : index
    %34 = vector.load %arg5[%c1_21, %c0_22, %c0_23] : memref<5x128x1xf32, #tpu.memory_space<vmem>>, vector<1x128x1xf32>
    %35 = vector.shape_cast %34 : vector<1x128x1xf32> to vector<128x1xf32>
    %36 = vector.broadcast %35 : vector<128x1xf32> to vector<128x256xf32>
    %37 = arith.addf %33, %36 : vector<128x256xf32>
    %cst_24 = arith.constant 5.000000e-01 : f32
    %38 = vector.broadcast %cst_24 : f32 to vector<128x256xf32>
    %39 = arith.mulf %38, %37 : vector<128x256xf32>
    %cst_25 = arith.constant 5.000000e-01 : f32
    %40 = vector.broadcast %cst_25 : f32 to vector<128x256xf32>
    %41 = arith.mulf %40, %37 : vector<128x256xf32>
    %42 = math.tanh %41 : vector<128x256xf32>
    %cst_26 = arith.constant 1.000000e+00 : f32
    %43 = vector.broadcast %cst_26 : f32 to vector<128x256xf32>
    %44 = arith.addf %42, %43 : vector<128x256xf32>
    %45 = arith.mulf %39, %44 : vector<128x256xf32>
    %c2 = arith.constant 2 : index
    %c0_27 = arith.constant 0 : index
    %c0_28 = arith.constant 0 : index
    %46 = vector.load %arg4[%c2, %c0_27, %c0_28] : memref<5x128x128xbf16, #tpu.memory_space<vmem>>, vector<1x128x128xbf16>
    %47 = vector.shape_cast %46 : vector<1x128x128xbf16> to vector<128x128xbf16>
    %48 = arith.truncf %45 : vector<128x256xf32> to vector<128x256xbf16>
    %cst_29 = arith.constant dense<0.000000e+00> : vector<128x256xf32>
    %49 = tpu.matmul %47, %48, %cst_29 {dimension_numbers = #tpu.dot_dimension_numbers<[1], [0], [0], [1], [0, 0, 1, 1], [], []>} : vector<128x128xbf16>, vector<128x256xbf16>, vector<128x256xf32> -> vector<128x256xf32>
    %c2_30 = arith.constant 2 : index
    %c0_31 = arith.constant 0 : index
    %c0_32 = arith.constant 0 : index
    %50 = vector.load %arg5[%c2_30, %c0_31, %c0_32] : memref<5x128x1xf32, #tpu.memory_space<vmem>>, vector<1x128x1xf32>
    %51 = vector.shape_cast %50 : vector<1x128x1xf32> to vector<128x1xf32>
    %52 = vector.broadcast %51 : vector<128x1xf32> to vector<128x256xf32>
    %53 = arith.addf %49, %52 : vector<128x256xf32>
    %cst_33 = arith.constant 5.000000e-01 : f32
    %54 = vector.broadcast %cst_33 : f32 to vector<128x256xf32>
    %55 = arith.mulf %54, %53 : vector<128x256xf32>
    %cst_34 = arith.constant 5.000000e-01 : f32
    %56 = vector.broadcast %cst_34 : f32 to vector<128x256xf32>
    %57 = arith.mulf %56, %53 : vector<128x256xf32>
    %58 = math.tanh %57 : vector<128x256xf32>
    %cst_35 = arith.constant 1.000000e+00 : f32
    %59 = vector.broadcast %cst_35 : f32 to vector<128x256xf32>
    %60 = arith.addf %58, %59 : vector<128x256xf32>
    %61 = arith.mulf %55, %60 : vector<128x256xf32>
    %c3 = arith.constant 3 : index
    %c0_36 = arith.constant 0 : index
    %c0_37 = arith.constant 0 : index
    %62 = vector.load %arg4[%c3, %c0_36, %c0_37] : memref<5x128x128xbf16, #tpu.memory_space<vmem>>, vector<1x128x128xbf16>
    %63 = vector.shape_cast %62 : vector<1x128x128xbf16> to vector<128x128xbf16>
    %64 = arith.truncf %61 : vector<128x256xf32> to vector<128x256xbf16>
    %cst_38 = arith.constant dense<0.000000e+00> : vector<128x256xf32>
    %65 = tpu.matmul %63, %64, %cst_38 {dimension_numbers = #tpu.dot_dimension_numbers<[1], [0], [0], [1], [0, 0, 1, 1], [], []>} : vector<128x128xbf16>, vector<128x256xbf16>, vector<128x256xf32> -> vector<128x256xf32>
    %c3_39 = arith.constant 3 : index
    %c0_40 = arith.constant 0 : index
    %c0_41 = arith.constant 0 : index
    %66 = vector.load %arg5[%c3_39, %c0_40, %c0_41] : memref<5x128x1xf32, #tpu.memory_space<vmem>>, vector<1x128x1xf32>
    %67 = vector.shape_cast %66 : vector<1x128x1xf32> to vector<128x1xf32>
    %68 = vector.broadcast %67 : vector<128x1xf32> to vector<128x256xf32>
    %69 = arith.addf %65, %68 : vector<128x256xf32>
    %cst_42 = arith.constant 5.000000e-01 : f32
    %70 = vector.broadcast %cst_42 : f32 to vector<128x256xf32>
    %71 = arith.mulf %70, %69 : vector<128x256xf32>
    %cst_43 = arith.constant 5.000000e-01 : f32
    %72 = vector.broadcast %cst_43 : f32 to vector<128x256xf32>
    %73 = arith.mulf %72, %69 : vector<128x256xf32>
    %74 = math.tanh %73 : vector<128x256xf32>
    %cst_44 = arith.constant 1.000000e+00 : f32
    %75 = vector.broadcast %cst_44 : f32 to vector<128x256xf32>
    %76 = arith.addf %74, %75 : vector<128x256xf32>
    %77 = arith.mulf %71, %76 : vector<128x256xf32>
    %c4 = arith.constant 4 : index
    %c0_45 = arith.constant 0 : index
    %c0_46 = arith.constant 0 : index
    %78 = vector.load %arg4[%c4, %c0_45, %c0_46] : memref<5x128x128xbf16, #tpu.memory_space<vmem>>, vector<1x128x128xbf16>
    %79 = vector.shape_cast %78 : vector<1x128x128xbf16> to vector<128x128xbf16>
    %80 = arith.truncf %77 : vector<128x256xf32> to vector<128x256xbf16>
    %cst_47 = arith.constant dense<0.000000e+00> : vector<128x256xf32>
    %81 = tpu.matmul %79, %80, %cst_47 {dimension_numbers = #tpu.dot_dimension_numbers<[1], [0], [0], [1], [0, 0, 1, 1], [], []>} : vector<128x128xbf16>, vector<128x256xbf16>, vector<128x256xf32> -> vector<128x256xf32>
    %c4_48 = arith.constant 4 : index
    %c0_49 = arith.constant 0 : index
    %c0_50 = arith.constant 0 : index
    %82 = vector.load %arg5[%c4_48, %c0_49, %c0_50] : memref<5x128x1xf32, #tpu.memory_space<vmem>>, vector<1x128x1xf32>
    %83 = vector.shape_cast %82 : vector<1x128x1xf32> to vector<128x1xf32>
    %84 = vector.broadcast %83 : vector<128x1xf32> to vector<128x256xf32>
    %85 = arith.addf %81, %84 : vector<128x256xf32>
    %cst_51 = arith.constant 5.000000e-01 : f32
    %86 = vector.broadcast %cst_51 : f32 to vector<128x256xf32>
    %87 = arith.mulf %86, %85 : vector<128x256xf32>
    %cst_52 = arith.constant 5.000000e-01 : f32
    %88 = vector.broadcast %cst_52 : f32 to vector<128x256xf32>
    %89 = arith.mulf %88, %85 : vector<128x256xf32>
    %90 = math.tanh %89 : vector<128x256xf32>
    %cst_53 = arith.constant 1.000000e+00 : f32
    %91 = vector.broadcast %cst_53 : f32 to vector<128x256xf32>
    %92 = arith.addf %90, %91 : vector<128x256xf32>
    %93 = arith.mulf %87, %92 : vector<128x256xf32>
    %c0_54 = arith.constant 0 : index
    %c0_55 = arith.constant 0 : index
    %94 = vector.load %arg6[%c0_54, %c0_55] : memref<8x128xbf16, #tpu.memory_space<vmem>>, vector<8x128xbf16>
    %95 = arith.truncf %93 : vector<128x256xf32> to vector<128x256xbf16>
    %cst_56 = arith.constant dense<0.000000e+00> : vector<8x256xf32>
    %96 = tpu.matmul %94, %95, %cst_56 {dimension_numbers = #tpu.dot_dimension_numbers<[1], [0], [0], [1], [0, 0, 1, 1], [], []>} : vector<8x128xbf16>, vector<128x256xbf16>, vector<8x256xf32> -> vector<8x256xf32>
    %c0_57 = arith.constant 0 : index
    %c0_58 = arith.constant 0 : index
    %97 = vector.load %arg7[%c0_57, %c0_58] : memref<8x1xf32, #tpu.memory_space<vmem>>, vector<8x1xf32>
    %98 = vector.broadcast %97 : vector<8x1xf32> to vector<8x256xf32>
    %99 = arith.addf %96, %98 : vector<8x256xf32>
    %c0_59 = arith.constant 0 : index
    %c0_60 = arith.constant 0 : index
    %100 = vector.load %arg8[%c0_59, %c0_60] : memref<8x256xf32, #tpu.memory_space<vmem>>, vector<8x256xf32>
    tpu.vector_store %arg8[%c0_59, %c0_60], %99 {strides = array<i32>} : memref<8x256xf32, #tpu.memory_space<vmem>>, vector<8x256xf32>,
    return
  }
  func.func @transform_0(%arg0: i32) -> (i32, i32) {
    %c0_i32 = arith.constant 0 : i32
    %c0_i32_0 = arith.constant 0 : i32
    return %c0_i32, %arg0 : i32, i32
  }
  func.func @transform_1(%arg0: i32) -> (i32, i32) {
    %c0_i32 = arith.constant 0 : i32
    %c0_i32_0 = arith.constant 0 : i32
    %c0_i32_1 = arith.constant 0 : i32
    return %c0_i32, %c0_i32_0 : i32, i32
  }
  func.func @transform_2(%arg0: i32) -> (i32, i32) {
    %c0_i32 = arith.constant 0 : i32
    %c0_i32_0 = arith.constant 0 : i32
    %c0_i32_1 = arith.constant 0 : i32
    return %c0_i32, %c0_i32_0 : i32, i32
  }
  func.func @transform_3(%arg0: i32) -> (i32, i32, i32) {
    %c0_i32 = arith.constant 0 : i32
    %c0_i32_0 = arith.constant 0 : i32
    %c0_i32_1 = arith.constant 0 : i32
    %c0_i32_2 = arith.constant 0 : i32
    return %c0_i32, %c0_i32_0, %c0_i32_1 : i32, i32, i32
  }
  func.func @transform_4(%arg0: i32) -> (i32, i32, i32) {
    %c0_i32 = arith.constant 0 : i32
    %c0_i32_0 = arith.constant 0 : i32
    %c0_i32_1 = arith.constant 0 : i32
    %c0_i32_2 = arith.constant 0 : i32
    return %c0_i32, %c0_i32_0, %c0_i32_1 : i32, i32, i32
  }
  func.func @transform_5(%arg0: i32) -> (i32, i32) {
    %c0_i32 = arith.constant 0 : i32
    %c0_i32_0 = arith.constant 0 : i32
    %c0_i32_1 = arith.constant 0 : i32
    return %c0_i32, %c0_i32_0 : i32, i32
  }
  func.func @transform_6(%arg0: i32) -> (i32, i32) {
    %c0_i32 = arith.constant 0 : i32
    %c0_i32_0 = arith.constant 0 : i32
    %c0_i32_1 = arith.constant 0 : i32
    return %c0_i32, %c0_i32_0 : i32, i32
  }
  func.func @transform_7(%arg0: i32) -> (i32, i32) {
    %c0_i32 = arith.constant 0 : i32
    %c0_i32_0 = arith.constant 0 : i32
    return %c0_i32, %arg0 : i32, i32
  }
}

</mosaic_0001>

<llo_original>
// kernel: ffn_forward.1
$region0: #{ffn_forward.1}
  #allocation0 [shape = 'u32[]', space=smem, size = 0x4, offset = 0x4, fixed_abs, tag = 'smem constant byte address 0x4 - core index']
  #allocation1 [shape = 'u32[144,128]{1,0:T(1,128)}', space=vmem, size = 0x12000, scoped, tag = 'internal scratch']
  %s0 = inlined_call_operand.vmem [shape: bf16[8,512], index: 0, kind: input, shape index: {}]
  %s1 = inlined_call_operand.vmem [shape: bf16[128,8], index: 1, kind: input, shape index: {}]
  %s2 = inlined_call_operand.vmem [shape: f32[128,1], index: 2, kind: input, shape index: {}]
  %s3 = inlined_call_operand.vmem [shape: bf16[5,128,128], index: 3, kind: input, shape index: {}]
  %s4 = inlined_call_operand.vmem [shape: f32[5,128,1], index: 4, kind: input, shape index: {}]
  %s5 = inlined_call_operand.vmem [shape: bf16[8,128], index: 5, kind: input, shape index: {}]
  %s6 = inlined_call_operand.vmem [shape: f32[8,1], index: 6, kind: input, shape index: {}]
  %s7 = inlined_call_operand.vmem [shape: f32[8,512], index: 7, kind: output, shape index: {}]
  %s8 = sld [smem:[#allocation0]]
  $region61: #{ffn_forward.1} parent=0
    _
  %s10 = ssub.s32 1, %s8
  %s11 = scalar_select 0, %s10, %s8
  loop: start=0, step=1, limit=4
  $region2: #{ffn_forward.1} parent=0 // loop_pre_header
    _
  $region3: #{ffn_forward.1} parent=0 // loop_header
    %s13 = sphi 0, %s17
    %p14 = scmp.ge.s32.totalorder %s13, 4
    %s23 = sphi 0, %s25
    %s26 = sphi 0, %s23
    %s27 = sphi 0, %s26
    %s43 = sphi 0, %s27
    %s47 = sphi 0, %s47
    %s49 = sphi 0, %s47
    %s50 = sphi 0, %s49
    %s64 = sphi 0, %s50
    %s68 = sphi 0, %s68
    %s70 = sphi 0, %s68
    %s71 = sphi 0, %s70
    %s85 = sphi 0, %s71
    %s89 = sphi 0, %s89
    %s91 = sphi 0, %s89
    %s92 = sphi 0, %s91
    %s106 = sphi 0, %s92
    %s110 = sphi 0, %s110
    %s112 = sphi 0, %s110
    %s113 = sphi 0, %s112
    %s127 = sphi 0, %s113
    %s131 = sphi 0, %s131
    %s133 = sphi 0, %s131
    %s134 = sphi 0, %s133
    %s148 = sphi 0, %s134
    %s152 = sphi 0, %s152
    %s154 = sphi 0, %s152
    %s155 = sphi 0, %s154
    %s169 = sphi 0, %s155
    %s175 = sphi 0, %s177
    %s178 = sphi 0, %s175
    %s179 = sphi 0, %s178
    %s195 = sphi 0, %s179
  $region4: #{ffn_forward.1} parent=0 // loop_header_branch
    %16 = sbr.rel (%p14) target = $region8
  $region5: #{ffn_forward.1} parent=0 // loop_body
    %s18 = ssub.s32 %s13, 1
    %s19 = ssub.s32 %s13, 2
    %s20 = sadd.s32 %s13, 1
    %s21 = ssub.s32 %s13, %s20
    %p22 = scmp.eq.s32.totalorder %s21, 0
    %s24 = sadd.s32 %s23, 1
    %s25 = scalar_select %p22, %s23, %s24
    %p28 = pneg %p22
    %p29 = scmp.eq.s32.totalorder %s13, 1
    %p30 = por %p28, %p29
    %p31 = scmp.ne.s32.totalorder %s23, %s26
    %p32 = scmp.eq.s32.totalorder %s13, 0
    %p33 = por %p31, %p32
    %p34 = scmp.ne.s32.totalorder %s23, %s26
    %p35 = scmp.eq.s32.totalorder %s18, 1
    %p36 = por %p34, %p35
    %p37 = scmp.ne.s32.totalorder %s26, %s27
    %p38 = scmp.eq.s32.totalorder %s18, 0
    %p39 = por %p37, %p38
    %p40 = scmp.ne.s32.totalorder %s26, %s27
    %p41 = scmp.eq.s32.totalorder %s19, 1
    %p42 = por %p40, %p41
    %p44 = scmp.ne.s32.totalorder %s27, %s43
    %p45 = scmp.eq.s32.totalorder %s19, 0
    %p46 = por %p44, %p45
    %s48 = sadd.s32 %s47, 1
    %p51 = scmp.eq.s32.totalorder %s13, 1
    %p52 = scmp.ne.s32.totalorder %s47, %s49
    %p53 = scmp.eq.s32.totalorder %s13, 0
    %p54 = por %p52, %p53
    %p55 = scmp.ne.s32.totalorder %s47, %s49
    %p56 = scmp.eq.s32.totalorder %s18, 1
    %p57 = por %p55, %p56
    %p58 = scmp.ne.s32.totalorder %s49, %s50
    %p59 = scmp.eq.s32.totalorder %s18, 0
    %p60 = por %p58, %p59
    %p61 = scmp.ne.s32.totalorder %s49, %s50
    %p62 = scmp.eq.s32.totalorder %s19, 1
    %p63 = por %p61, %p62
    %p65 = scmp.ne.s32.totalorder %s50, %s64
    %p66 = scmp.eq.s32.totalorder %s19, 0
    %p67 = por %p65, %p66
    %s69 = sadd.s32 %s68, 1
    %p72 = scmp.eq.s32.totalorder %s13, 1
    %p73 = scmp.ne.s32.totalorder %s68, %s70
    %p74 = scmp.eq.s32.totalorder %s13, 0
    %p75 = por %p73, %p74
    %p76 = scmp.ne.s32.totalorder %s68, %s70
    %p77 = scmp.eq.s32.totalorder %s18, 1
    %p78 = por %p76, %p77
    %p79 = scmp.ne.s32.totalorder %s70, %s71
    %p80 = scmp.eq.s32.totalorder %s18, 0
    %p81 = por %p79, %p80
    %p82 = scmp.ne.s32.totalorder %s70, %s71
    %p83 = scmp.eq.s32.totalorder %s19, 1
    %p84 = por %p82, %p83
    %p86 = scmp.ne.s32.totalorder %s71, %s85
    %p87 = scmp.eq.s32.totalorder %s19, 0
    %p88 = por %p86, %p87
    %s90 = sadd.s32 %s89, 1
    %p93 = scmp.eq.s32.totalorder %s13, 1
    %p94 = scmp.ne.s32.totalorder %s89, %s91
    %p95 = scmp.eq.s32.totalorder %s13, 0
    %p96 = por %p94, %p95
    %p97 = scmp.ne.s32.totalorder %s89, %s91
    %p98 = scmp.eq.s32.totalorder %s18, 1
    %p99 = por %p97, %p98
    %p100 = scmp.ne.s32.totalorder %s91, %s92
    %p101 = scmp.eq.s32.totalorder %s18, 0
    %p102 = por %p100, %p101
    %p103 = scmp.ne.s32.totalorder %s91, %s92
    %p104 = scmp.eq.s32.totalorder %s19, 1
    %p105 = por %p103, %p104
    %p107 = scmp.ne.s32.totalorder %s92, %s106
    %p108 = scmp.eq.s32.totalorder %s19, 0
    %p109 = por %p107, %p108
    %s111 = sadd.s32 %s110, 1
    %p114 = scmp.eq.s32.totalorder %s13, 1
    %p115 = scmp.ne.s32.totalorder %s110, %s112
    %p116 = scmp.eq.s32.totalorder %s13, 0
    %p117 = por %p115, %p116
    %p118 = scmp.ne.s32.totalorder %s110, %s112
    %p119 = scmp.eq.s32.totalorder %s18, 1
    %p120 = por %p118, %p119
    %p121 = scmp.ne.s32.totalorder %s112, %s113
    %p122 = scmp.eq.s32.totalorder %s18, 0
    %p123 = por %p121, %p122
    %p124 = scmp.ne.s32.totalorder %s112, %s113
    %p125 = scmp.eq.s32.totalorder %s19, 1
    %p126 = por %p124, %p125
    %p128 = scmp.ne.s32.totalorder %s113, %s127
    %p129 = scmp.eq.s32.totalorder %s19, 0
    %p130 = por %p128, %p129
    %s132 = sadd.s32 %s131, 1
    %p135 = scmp.eq.s32.totalorder %s13, 1
    %p136 = scmp.ne.s32.totalorder %s131, %s133
    %p137 = scmp.eq.s32.totalorder %s13, 0
    %p138 = por %p136, %p137
    %p139 = scmp.ne.s32.totalorder %s131, %s133
    %p140 = scmp.eq.s32.totalorder %s18, 1
    %p141 = por %p139, %p140
    %p142 = scmp.ne.s32.totalorder %s133, %s134
    %p143 = scmp.eq.s32.totalorder %s18, 0
    %p144 = por %p142, %p143
    %p145 = scmp.ne.s32.totalorder %s133, %s134
    %p146 = scmp.eq.s32.totalorder %s19, 1
    %p147 = por %p145, %p146
    %p149 = scmp.ne.s32.totalorder %s134, %s148
    %p150 = scmp.eq.s32.totalorder %s19, 0
    %p151 = por %p149, %p150
    %s153 = sadd.s32 %s152, 1
    %p156 = scmp.eq.s32.totalorder %s13, 1
    %p157 = scmp.ne.s32.totalorder %s152, %s154
    %p158 = scmp.eq.s32.totalorder %s13, 0
    %p159 = por %p157, %p158
    %p160 = scmp.ne.s32.totalorder %s152, %s154
    %p161 = scmp.eq.s32.totalorder %s18, 1
    %p162 = por %p160, %p161
    %p163 = scmp.ne.s32.totalorder %s154, %s155
    %p164 = scmp.eq.s32.totalorder %s18, 0
    %p165 = por %p163, %p164
    %p166 = scmp.ne.s32.totalorder %s154, %s155
    %p167 = scmp.eq.s32.totalorder %s19, 1
    %p168 = por %p166, %p167
    %p170 = scmp.ne.s32.totalorder %s155, %s169
    %p171 = scmp.eq.s32.totalorder %s19, 0
    %p172 = por %p170, %p171
    %s173 = ssub.s32 %s13, %s20
    %p174 = scmp.eq.s32.totalorder %s173, 0
    %s176 = sadd.s32 %s175, 1
    %s177 = scalar_select %p174, %s175, %s176
    %p180 = pneg %p174
    %p181 = scmp.eq.s32.totalorder %s13, 1
    %p182 = por %p180, %p181
    %p183 = scmp.ne.s32.totalorder %s175, %s178
    %p184 = scmp.eq.s32.totalorder %s13, 0
    %p185 = por %p183, %p184
    %p186 = scmp.ne.s32.totalorder %s175, %s178
    %p187 = scmp.eq.s32.totalorder %s18, 1
    %p188 = por %p186, %p187
    %p189 = scmp.ne.s32.totalorder %s178, %s179
    %p190 = scmp.eq.s32.totalorder %s18, 0
    %p191 = por %p189, %p190
    %p192 = scmp.ne.s32.totalorder %s178, %s179
    %p193 = scmp.eq.s32.totalorder %s19, 1
    %p194 = por %p192, %p193
    %p196 = scmp.ne.s32.totalorder %s179, %s195
    %p197 = scmp.eq.s32.totalorder %s19, 0
    %p198 = por %p196, %p197
    %p199 = scmp.le.s32.totalorder 1, %s13
    %p200 = scmp.lt.s32.totalorder %s13, 3
    %p201 = pnand %p199, %p200
    %p202 = pneg %p201
    // Predicated region
    $region9: #{ffn_forward.1} parent=5 // pred_check
      _
    $region10: #{ffn_forward.1} parent=5 // pred_check_branch
      %204 = sbr.rel (%p201) target = $region12
    $region11: #{ffn_forward.1} parent=5 // pred_region
      %s205 = ssub.s32 %s13, 1
      // Predicated region
      $region13: #{ffn_forward.1} parent=11 // pred_check
        %p206 = pneg %p60
      $region14: #{ffn_forward.1} parent=11 // pred_check_branch
        %208 = sbr.rel (%p206) target = $region16
      $region15: #{ffn_forward.1} parent=11 // pred_region
        _
      $region16: #{ffn_forward.1} parent=11 // pred_fallthru
        _
      // Predicated region
      $region17: #{ffn_forward.1} parent=11 // pred_check
        %p209 = pneg %p81
      $region18: #{ffn_forward.1} parent=11 // pred_check_branch
        %211 = sbr.rel (%p209) target = $region20
      $region19: #{ffn_forward.1} parent=11 // pred_region
        _
      $region20: #{ffn_forward.1} parent=11 // pred_fallthru
        _
      // Predicated region
      $region21: #{ffn_forward.1} parent=11 // pred_check
        %p212 = pneg %p102
      $region22: #{ffn_forward.1} parent=11 // pred_check_branch
        %214 = sbr.rel (%p212) target = $region24
      $region23: #{ffn_forward.1} parent=11 // pred_region
        _
      $region24: #{ffn_forward.1} parent=11 // pred_fallthru
        _
      // Predicated region
      $region25: #{ffn_forward.1} parent=11 // pred_check
        %p215 = pneg %p123
      $region26: #{ffn_forward.1} parent=11 // pred_check_branch
        %217 = sbr.rel (%p215) target = $region28
      $region27: #{ffn_forward.1} parent=11 // pred_region
        _
      $region28: #{ffn_forward.1} parent=11 // pred_fallthru
        _
      // Predicated region
      $region29: #{ffn_forward.1} parent=11 // pred_check
        %p218 = pneg %p144
      $region30: #{ffn_forward.1} parent=11 // pred_check_branch
        %220 = sbr.rel (%p218) target = $region32
      $region31: #{ffn_forward.1} parent=11 // pred_region
        _
      $region32: #{ffn_forward.1} parent=11 // pred_fallthru
        _
      // Predicated region
      $region33: #{ffn_forward.1} parent=11 // pred_check
        %p221 = pneg %p165
      $region34: #{ffn_forward.1} parent=11 // pred_check_branch
        %223 = sbr.rel (%p221) target = $region36
      $region35: #{ffn_forward.1} parent=11 // pred_region
        _
      $region36: #{ffn_forward.1} parent=11 // pred_fallthru
        _
    $region12: #{ffn_forward.1} parent=5 // pred_fallthru
      _
    %p224 = scmp.lt.s32.totalorder %s13, 2
    // Predicated region
    $region37: #{ffn_forward.1} parent=5 // pred_check
      %p225 = pneg %p224
    $region38: #{ffn_forward.1} parent=5 // pred_check_branch
      %227 = sbr.rel (%p225) target = $region40
    $region39: #{ffn_forward.1} parent=5 // pred_region
      // Predicated region
      $region41: #{ffn_forward.1} parent=39 // pred_check
        %p228 = pneg %p33
      $region42: #{ffn_forward.1} parent=39 // pred_check_branch
        %230 = sbr.rel (%p228) target = $region44
      $region43: #{ffn_forward.1} parent=39 // pred_region
        %s231 = smul.u32 2, %s13
        %p232 = scmp.lt.s32.totalorder %s231, 3
        %s233 = scalar_select %p232, %s231, 3
        %s234 = smul.addr %s233, 4
        %s235 = scalar_lea.vmem %s0, %s234
        %s236 = smul.u32 2, %s13
      $region44: #{ffn_forward.1} parent=39 // pred_fallthru
        _
    $region40: #{ffn_forward.1} parent=5 // pred_fallthru
      _
    %p237 = scmp.le.s32.totalorder 1, %s13
    %p238 = scmp.lt.s32.totalorder %s13, 3
    %p239 = pnand %p237, %p238
    %p240 = pneg %p239
    // Predicated region
    $region45: #{ffn_forward.1} parent=5 // pred_check
      _
    $region46: #{ffn_forward.1} parent=5 // pred_check_branch
      %242 = sbr.rel (%p239) target = $region48
    $region47: #{ffn_forward.1} parent=5 // pred_region
      %s243 = ssub.s32 %s13, 1
      %s244 = smul.u32 2, %s18
      %p245 = scmp.lt.s32.totalorder %s244, 3
      %s246 = scalar_select %p245, %s244, 3
      %s247 = smul.addr %s246, 4
      %s248 = scalar_lea.vmem %s0, %s247
      %p249 = pneg %p39
      %p250 = pneg %p36
      %p251 = pneg %p60
      %p252 = pneg %p57
      %p253 = pneg %p81
      %p254 = pneg %p78
      %p255 = pneg %p102
      %p256 = pneg %p99
      %p257 = pneg %p123
      %p258 = pneg %p120
      %p259 = pneg %p144
      %p260 = pneg %p141
      %p261 = pneg %p165
      %p262 = pneg %p162
      %p263 = pneg %p191
      %p264 = pneg %p188
      %s265 = smul.u32 2, %s18
      %p266 = scmp.lt.s32.totalorder %s265, 3
      %s267 = scalar_select %p266, %s265, 3
      %s268 = smul.addr %s267, 8
      %s269 = scalar_lea.vmem %s7, %s268
      %s270 = smul.u32 2, %s18
      %p271 = scmp.lt.s32.totalorder %s270, 3
      %s272 = scalar_select %p271, %s270, 3
      %s273 = smul.addr %s272, 4
      %s274 = scalar_lea.vmem %s0, %s273
      %s275 = smul.u32 2, %s18
      %s276 = smul.u32 2, %s18
      %p277 = scmp.lt.s32.totalorder %s276, 3
      %s278 = scalar_select %p277, %s276, 3
      %s279 = smul.addr %s278, 8
      %s280 = scalar_lea.vmem %s7, %s279
      %s281 = smul.u32 2, %s18
      %v283 = vld [vmem:[%s274] sm:$0xff]
      %v284 = vld [vmem:[%s1] sm:$0xf]
      %v285 = vld [vmem:[%s1 + $0x4] sm:$0xf]
      %v286 = vld [vmem:[%s1 + $0x8] sm:$0xf]
      %v287 = vld [vmem:[%s1 + $0xc] sm:$0xf]
      %v288 = vld [vmem:[%s1 + $0x10] sm:$0xf]
      %v289 = vld [vmem:[%s1 + $0x14] sm:$0xf]
      %v290 = vld [vmem:[%s1 + $0x18] sm:$0xf]
      %v291 = vld [vmem:[%s1 + $0x1c] sm:$0xf]
      %v292 = vld [vmem:[%s1 + $0x20] sm:$0xf]
      %v293 = vld [vmem:[%s1 + $0x24] sm:$0xf]
      %v294 = vld [vmem:[%s1 + $0x28] sm:$0xf]
      %v295 = vld [vmem:[%s1 + $0x2c] sm:$0xf]
      %v296 = vld [vmem:[%s1 + $0x30] sm:$0xf]
      %v297 = vld [vmem:[%s1 + $0x34] sm:$0xf]
      %v298 = vld [vmem:[%s1 + $0x38] sm:$0xf]
      %v299 = vld [vmem:[%s1 + $0x3c] sm:$0xf]
      %v300 = vld [vmem:[%s2] sm:$0xff]
      %v301 = vld [vmem:[%s2 + $0x8] sm:$0xff]
      %v302 = vld [vmem:[%s2 + $0x10] sm:$0xff]
      %v303 = vld [vmem:[%s2 + $0x18] sm:$0xff]
      %v304 = vld [vmem:[%s2 + $0x20] sm:$0xff]
      %v305 = vld [vmem:[%s2 + $0x28] sm:$0xff]
      %v306 = vld [vmem:[%s2 + $0x30] sm:$0xff]
      %v307 = vld [vmem:[%s2 + $0x38] sm:$0xff]
      %v308 = vld [vmem:[%s2 + $0x40] sm:$0xff]
      %v309 = vld [vmem:[%s2 + $0x48] sm:$0xff]
      %v310 = vld [vmem:[%s2 + $0x50] sm:$0xff]
      %v311 = vld [vmem:[%s2 + $0x58] sm:$0xff]
      %v312 = vld [vmem:[%s2 + $0x60] sm:$0xff]
      %v313 = vld [vmem:[%s2 + $0x68] sm:$0xff]
      %v314 = vld [vmem:[%s2 + $0x70] sm:$0xff]
      %v315 = vld [vmem:[%s2 + $0x78] sm:$0xff]
      %317 = vset.pattern.permute.xlu0 0
      %318 = vperm.xlu0 %317, %v300
      %v319 = vpop.permute.xlu0 %318
      %322 = vset.pattern.permute.xlu0 0
      %323 = vperm.xlu0 %322, %v301
      %v324 = vpop.permute.xlu0 %323
      %327 = vset.pattern.permute.xlu0 0
      %328 = vperm.xlu0 %327, %v302
      %v329 = vpop.permute.xlu0 %328
      %332 = vset.pattern.permute.xlu0 0
      %333 = vperm.xlu0 %332, %v303
      %v334 = vpop.permute.xlu0 %333
      %337 = vset.pattern.permute.xlu0 0
      %338 = vperm.xlu0 %337, %v304
      %v339 = vpop.permute.xlu0 %338
      %342 = vset.pattern.permute.xlu0 0
      %343 = vperm.xlu0 %342, %v305
      %v344 = vpop.permute.xlu0 %343
      %347 = vset.pattern.permute.xlu0 0
      %348 = vperm.xlu0 %347, %v306
      %v349 = vpop.permute.xlu0 %348
      %352 = vset.pattern.permute.xlu0 0
      %353 = vperm.xlu0 %352, %v307
      %v354 = vpop.permute.xlu0 %353
      %357 = vset.pattern.permute.xlu0 0
      %358 = vperm.xlu0 %357, %v308
      %v359 = vpop.permute.xlu0 %358
      %362 = vset.pattern.permute.xlu0 0
      %363 = vperm.xlu0 %362, %v309
      %v364 = vpop.permute.xlu0 %363
      %367 = vset.pattern.permute.xlu0 0
      %368 = vperm.xlu0 %367, %v310
      %v369 = vpop.permute.xlu0 %368
      %372 = vset.pattern.permute.xlu0 0
      %373 = vperm.xlu0 %372, %v311
      %v374 = vpop.permute.xlu0 %373
      %377 = vset.pattern.permute.xlu0 0
      %378 = vperm.xlu0 %377, %v312
      %v379 = vpop.permute.xlu0 %378
      %382 = vset.pattern.permute.xlu0 0
      %383 = vperm.xlu0 %382, %v313
      %v384 = vpop.permute.xlu0 %383
      %387 = vset.pattern.permute.xlu0 0
      %388 = vperm.xlu0 %387, %v314
      %v389 = vpop.permute.xlu0 %388
      %392 = vset.pattern.permute.xlu0 0
      %393 = vperm.xlu0 %392, %v315
      %v394 = vpop.permute.xlu0 %393
      %v412 = vunpack.c.l.b16 %v284
      %v413 = vunpack.c.l.b16 %v285
      %v414 = vunpack.c.l.b16 %v286
      %v415 = vunpack.c.l.b16 %v287
      %v416 = vunpack.c.l.b16 %v288
      %v417 = vunpack.c.l.b16 %v289
      %v418 = vunpack.c.l.b16 %v290
      %v419 = vunpack.c.l.b16 %v291
      %v420 = vunpack.c.l.b16 %v292
      %v421 = vunpack.c.l.b16 %v293
      %v422 = vunpack.c.l.b16 %v294
      %v423 = vunpack.c.l.b16 %v295
      %v424 = vunpack.c.l.b16 %v296
      %v425 = vunpack.c.l.b16 %v297
      %v426 = vunpack.c.l.b16 %v298
      %v427 = vunpack.c.l.b16 %v299
      %v428 = vpack.c.b16 %v413, %v412
      %v429 = vpack.c.b16 %v415, %v414
      %v430 = vpack.c.b16 %v417, %v416
      %v431 = vpack.c.b16 %v419, %v418
      %v432 = vpack.c.b16 %v421, %v420
      %v433 = vpack.c.b16 %v423, %v422
      %v434 = vpack.c.b16 %v425, %v424
      %v435 = vpack.c.b16 %v427, %v426
      %v437 = vunpack.c.l.b16 %v283
      %v438 = vunpack.c.h.b16 %v283
      %v439 = vpack.c.b16 %v437, %v437
      %v440 = vpack.c.b16 %v438, %v438
      %vm441 = vcmask 64512
      %v443 = vsel %vm441, %v428, 0
      %v446 = vsel %vm441, %v429, 0
      %v449 = vsel %vm441, %v430, 0
      %v452 = vsel %vm441, %v431, 0
      %v455 = vsel %vm441, %v432, 0
      %v458 = vsel %vm441, %v433, 0
      %v461 = vsel %vm441, %v434, 0
      %v464 = vsel %vm441, %v435, 0
      %vm466 = vcmask 1043456
      %v468 = vsel %vm466, %v439, 0
      %v471 = vsel %vm466, %v440, 0
      %473 = vmatprep.subr.bf16.mxu0 0
      %474 = vmatpush1.bf16.msra.mxu0 0
      %475 = vmatprep.subr.bf16.mxu0 0
      %476 = vmatpush1.bf16.msra.mxu0 0
      %477 = vmatprep.subr.bf16.mxu0 0
      %478 = vmatpush1.bf16.msra.mxu0 0
      %479 = vmatprep.subr.bf16.mxu0 0
      %480 = vmatpush1.bf16.msra.mxu0 0
      %481 = vmatprep.subr.bf16.mxu0 0
      %482 = vmatpush1.bf16.msra.mxu0 0
      %483 = vmatprep.subr.bf16.mxu0 0
      %484 = vmatpush1.bf16.msra.mxu0 0
      %485 = vmatprep.subr.bf16.mxu0 0
      %486 = vmatpush1.bf16.msra.mxu0 0
      %487 = vmatprep.subr.bf16.mxu0 %v471
      %488 = vmatpush1.bf16.msra.mxu0 %v468
      %489 = vmatprep.subr.bf16.mxu0 0
      %490 = vmatpush2.bf16.msra.mxu0 0
      %491 = vmatprep.subr.bf16.mxu0 0
      %492 = vmatpush2.bf16.msra.mxu0 0
      %493 = vmatprep.subr.bf16.mxu0 0
      %494 = vmatpush2.bf16.msra.mxu0 0
      %495 = vmatprep.subr.bf16.mxu0 0
      %496 = vmatpush2.bf16.msra.mxu0 0
      %497 = vmatprep.subr.bf16.mxu0 0
      %498 = vmatpush2.bf16.msra.mxu0 0
      %499 = vmatprep.subr.bf16.mxu0 0
      %500 = vmatpush2.bf16.msra.mxu0 0
      %501 = vmatprep.subr.bf16.mxu0 0
      %502 = vmatpush2.bf16.msra.mxu0 0
      %503 = vmatprep.subr.bf16.mxu0 0
      %504 = vmatpush2.bf16.msra.mxu0 0
      %505 = vmatprep.mubr.bf16.mxu0 0
      %506 = vmatmul.mubr.bf16.gmra.mxu0 %v443
      %v507 = vpop.f32.mrf.mxu0
      %v508 = vadd.f32 %v319, %v507
      %v509 = vpop.f32.mrf.mxu0
      %v510 = vadd.f32 %v319, %v509
      %v511 = vpop.f32.mrf.mxu0
      %v512 = vadd.f32 %v324, %v511
      %v513 = vpop.f32.mrf.mxu0
      %v514 = vadd.f32 %v324, %v513
      %515 = vmatprep.mubr.bf16.mxu0 0
      %516 = vmatmul.mubr.bf16.gmra.mxu0 %v446
      %v517 = vpop.f32.mrf.mxu0
      %v518 = vadd.f32 %v329, %v517
      %v519 = vpop.f32.mrf.mxu0
      %v520 = vadd.f32 %v329, %v519
      %v521 = vpop.f32.mrf.mxu0
      %v522 = vadd.f32 %v334, %v521
      %v523 = vpop.f32.mrf.mxu0
      %v524 = vadd.f32 %v334, %v523
      %525 = vmatprep.mubr.bf16.mxu0 0
      %526 = vmatmul.mubr.bf16.gmra.mxu0 %v449
      %v527 = vpop.f32.mrf.mxu0
      %v528 = vadd.f32 %v339, %v527
      %v529 = vpop.f32.mrf.mxu0
      %v530 = vadd.f32 %v339, %v529
      %v531 = vpop.f32.mrf.mxu0
      %v532 = vadd.f32 %v344, %v531
      %v533 = vpop.f32.mrf.mxu0
      %v534 = vadd.f32 %v344, %v533
      %535 = vmatprep.mubr.bf16.mxu0 0
      %536 = vmatmul.mubr.bf16.gmra.mxu0 %v452
      %v537 = vpop.f32.mrf.mxu0
      %v538 = vadd.f32 %v349, %v537
      %v539 = vpop.f32.mrf.mxu0
      %v540 = vadd.f32 %v349, %v539
      %v541 = vpop.f32.mrf.mxu0
      %v542 = vadd.f32 %v354, %v541
      %v543 = vpop.f32.mrf.mxu0
      %v544 = vadd.f32 %v354, %v543
      %545 = vmatprep.mubr.bf16.mxu0 0
      %546 = vmatmul.mubr.bf16.gmra.mxu0 %v455
      %v547 = vpop.f32.mrf.mxu0
      %v548 = vadd.f32 %v359, %v547
      %v549 = vpop.f32.mrf.mxu0
      %v550 = vadd.f32 %v359, %v549
      %v551 = vpop.f32.mrf.mxu0
      %v552 = vadd.f32 %v364, %v551
      %v553 = vpop.f32.mrf.mxu0
      %v554 = vadd.f32 %v364, %v553
      %555 = vmatprep.mubr.bf16.mxu0 0
      %556 = vmatmul.mubr.bf16.gmra.mxu0 %v458
      %v557 = vpop.f32.mrf.mxu0
      %v558 = vadd.f32 %v369, %v557
      %v559 = vpop.f32.mrf.mxu0
      %v560 = vadd.f32 %v369, %v559
      %v561 = vpop.f32.mrf.mxu0
      %v562 = vadd.f32 %v374, %v561
      %v563 = vpop.f32.mrf.mxu0
      %v564 = vadd.f32 %v374, %v563
      %565 = vmatprep.mubr.bf16.mxu0 0
      %566 = vmatmul.mubr.bf16.gmra.mxu0 %v461
      %v567 = vpop.f32.mrf.mxu0
      %v568 = vadd.f32 %v379, %v567
      %v569 = vpop.f32.mrf.mxu0
      %v570 = vadd.f32 %v379, %v569
      %v571 = vpop.f32.mrf.mxu0
      %v572 = vadd.f32 %v384, %v571
      %v573 = vpop.f32.mrf.mxu0
      %v574 = vadd.f32 %v384, %v573
      %575 = vmatprep.mubr.bf16.mxu0 0
      %576 = vmatmul.mubr.bf16.gmra.mxu0 %v464
      %v577 = vpop.f32.mrf.mxu0
      %v578 = vadd.f32 %v389, %v577
      %v579 = vpop.f32.mrf.mxu0
      %v580 = vadd.f32 %v389, %v579
      %v581 = vpop.f32.mrf.mxu0
      %v582 = vadd.f32 %v394, %v581
      %v583 = vpop.f32.mrf.mxu0
      %v584 = vadd.f32 %v394, %v583
      %585 = vdwg.mxu0
      %v586 = vmul.f32 %v508, 0.5
      %v587 = vmul.f32 %v510, 0.5
      %v588 = vmul.f32 %v512, 0.5
      %v589 = vmul.f32 %v514, 0.5
      %v590 = vmul.f32 %v518, 0.5
      %v591 = vmul.f32 %v520, 0.5
      %v592 = vmul.f32 %v522, 0.5
      %v593 = vmul.f32 %v524, 0.5
      %v594 = vmul.f32 %v528, 0.5
      %v595 = vmul.f32 %v530, 0.5
      %v596 = vmul.f32 %v532, 0.5
      %v597 = vmul.f32 %v534, 0.5
      %v598 = vmul.f32 %v538, 0.5
      %v599 = vmul.f32 %v540, 0.5
      %v600 = vmul.f32 %v542, 0.5
      %v601 = vmul.f32 %v544, 0.5
      %v602 = vmul.f32 %v548, 0.5
      %v603 = vmul.f32 %v550, 0.5
      %v604 = vmul.f32 %v552, 0.5
      %v605 = vmul.f32 %v554, 0.5
      %v606 = vmul.f32 %v558, 0.5
      %v607 = vmul.f32 %v560, 0.5
      %v608 = vmul.f32 %v562, 0.5
      %v609 = vmul.f32 %v564, 0.5
      %v610 = vmul.f32 %v568, 0.5
      %v611 = vmul.f32 %v570, 0.5
      %v612 = vmul.f32 %v572, 0.5
      %v613 = vmul.f32 %v574, 0.5
      %v614 = vmul.f32 %v578, 0.5
      %v615 = vmul.f32 %v580, 0.5
      %v616 = vmul.f32 %v582, 0.5
      %v617 = vmul.f32 %v584, 0.5
      %v618 = vtanh.pop %v586
      %v619 = vtanh.pop %v587
      %v620 = vtanh.pop %v588
      %v621 = vtanh.pop %v589
      %v622 = vtanh.pop %v590
      %v623 = vtanh.pop %v591
      %v624 = vtanh.pop %v592
      %v625 = vtanh.pop %v593
      %v626 = vtanh.pop %v594
      %v627 = vtanh.pop %v595
      %v628 = vtanh.pop %v596
      %v629 = vtanh.pop %v597
      %v630 = vtanh.pop %v598
      %v631 = vtanh.pop %v599
      %v632 = vtanh.pop %v600
      %v633 = vtanh.pop %v601
      %v634 = vtanh.pop %v602
      %v635 = vtanh.pop %v603
      %v636 = vtanh.pop %v604
      %v637 = vtanh.pop %v605
      %v638 = vtanh.pop %v606
      %v639 = vtanh.pop %v607
      %v640 = vtanh.pop %v608
      %v641 = vtanh.pop %v609
      %v642 = vtanh.pop %v610
      %v643 = vtanh.pop %v611
      %v644 = vtanh.pop %v612
      %v645 = vtanh.pop %v613
      %v646 = vtanh.pop %v614
      %v647 = vtanh.pop %v615
      %v648 = vtanh.pop %v616
      %v649 = vtanh.pop %v617
      %v650 = vadd.f32 %v618, 1.0
      %v651 = vadd.f32 %v619, 1.0
      %v652 = vadd.f32 %v620, 1.0
      %v653 = vadd.f32 %v621, 1.0
      %v654 = vadd.f32 %v622, 1.0
      %v655 = vadd.f32 %v623, 1.0
      %v656 = vadd.f32 %v624, 1.0
      %v657 = vadd.f32 %v625, 1.0
      %v658 = vadd.f32 %v626, 1.0
      %v659 = vadd.f32 %v627, 1.0
      %v660 = vadd.f32 %v628, 1.0
      %v661 = vadd.f32 %v629, 1.0
      %v662 = vadd.f32 %v630, 1.0
      %v663 = vadd.f32 %v631, 1.0
      %v664 = vadd.f32 %v632, 1.0
      %v665 = vadd.f32 %v633, 1.0
      %v666 = vadd.f32 %v634, 1.0
      %v667 = vadd.f32 %v635, 1.0
      %v668 = vadd.f32 %v636, 1.0
      %v669 = vadd.f32 %v637, 1.0
      %v670 = vadd.f32 %v638, 1.0
      %v671 = vadd.f32 %v639, 1.0
      %v672 = vadd.f32 %v640, 1.0
      %v673 = vadd.f32 %v641, 1.0
      %v674 = vadd.f32 %v642, 1.0
      %v675 = vadd.f32 %v643, 1.0
      %v676 = vadd.f32 %v644, 1.0
      %v677 = vadd.f32 %v645, 1.0
      %v678 = vadd.f32 %v646, 1.0
      %v679 = vadd.f32 %v647, 1.0
      %v680 = vadd.f32 %v648, 1.0
      %v681 = vadd.f32 %v649, 1.0
      %v682 = vmul.f32 %v586, %v650
      %v683 = vmul.f32 %v587, %v651
      %v684 = vmul.f32 %v588, %v652
      %v685 = vmul.f32 %v589, %v653
      %v686 = vmul.f32 %v590, %v654
      %v687 = vmul.f32 %v591, %v655
      %v688 = vmul.f32 %v592, %v656
      %v689 = vmul.f32 %v593, %v657
      %v690 = vmul.f32 %v594, %v658
      %v691 = vmul.f32 %v595, %v659
      %v692 = vmul.f32 %v596, %v660
      %v693 = vmul.f32 %v597, %v661
      %v694 = vmul.f32 %v598, %v662
      %v695 = vmul.f32 %v599, %v663
      %v696 = vmul.f32 %v600, %v664
      %v697 = vmul.f32 %v601, %v665
      %v698 = vmul.f32 %v602, %v666
      %v699 = vmul.f32 %v603, %v667
      %v700 = vmul.f32 %v604, %v668
      %v701 = vmul.f32 %v605, %v669
      %v702 = vmul.f32 %v606, %v670
      %v703 = vmul.f32 %v607, %v671
      %v704 = vmul.f32 %v608, %v672
      %v705 = vmul.f32 %v609, %v673
      %v706 = vmul.f32 %v610, %v674
      %v707 = vmul.f32 %v611, %v675
      %v708 = vmul.f32 %v612, %v676
      %v709 = vmul.f32 %v613, %v677
      %v710 = vmul.f32 %v614, %v678
      %v711 = vmul.f32 %v615, %v679
      %v712 = vmul.f32 %v616, %v680
      %v713 = vmul.f32 %v617, %v681
      %v714 = vld [vmem:[%s3] sm:$0xf]
      %v715 = vld [vmem:[%s3 + $0x4] sm:$0xf]
      %v716 = vld [vmem:[%s3 + $0x8] sm:$0xf]
      %v717 = vld [vmem:[%s3 + $0xc] sm:$0xf]
      %v718 = vld [vmem:[%s3 + $0x10] sm:$0xf]
      %v719 = vld [vmem:[%s3 + $0x14] sm:$0xf]
      %v720 = vld [vmem:[%s3 + $0x18] sm:$0xf]
      %v721 = vld [vmem:[%s3 + $0x1c] sm:$0xf]
      %v722 = vld [vmem:[%s3 + $0x20] sm:$0xf]
      %v723 = vld [vmem:[%s3 + $0x24] sm:$0xf]
      %v724 = vld [vmem:[%s3 + $0x28] sm:$0xf]
      %v725 = vld [vmem:[%s3 + $0x2c] sm:$0xf]
      %v726 = vld [vmem:[%s3 + $0x30] sm:$0xf]
      %v727 = vld [vmem:[%s3 + $0x34] sm:$0xf]
      %v728 = vld [vmem:[%s3 + $0x38] sm:$0xf]
      %v729 = vld [vmem:[%s3 + $0x3c] sm:$0xf]
      %v730 = vpack.c.bf16 %v684, %v682
      %v731 = vpack.c.bf16 %v685, %v683
      %v732 = vpack.c.bf16 %v688, %v686
      %v733 = vpack.c.bf16 %v689, %v687
      %v734 = vpack.c.bf16 %v692, %v690
      %v735 = vpack.c.bf16 %v693, %v691
      %v736 = vpack.c.bf16 %v696, %v694
      %v737 = vpack.c.bf16 %v697, %v695
      %v738 = vpack.c.bf16 %v700, %v698
      %v739 = vpack.c.bf16 %v701, %v699
      %v740 = vpack.c.bf16 %v704, %v702
      %v741 = vpack.c.bf16 %v705, %v703
      %v742 = vpack.c.bf16 %v708, %v706
      %v743 = vpack.c.bf16 %v709, %v707
      %v744 = vpack.c.bf16 %v712, %v710
      %v745 = vpack.c.bf16 %v713, %v711
      %v746 = vld [vmem:[%s4] sm:$0xff]
      %v747 = vld [vmem:[%s4 + $0x8] sm:$0xff]
      %v748 = vld [vmem:[%s4 + $0x10] sm:$0xff]
      %v749 = vld [vmem:[%s4 + $0x18] sm:$0xff]
      %v750 = vld [vmem:[%s4 + $0x20] sm:$0xff]
      %v751 = vld [vmem:[%s4 + $0x28] sm:$0xff]
      %v752 = vld [vmem:[%s4 + $0x30] sm:$0xff]
      %v753 = vld [vmem:[%s4 + $0x38] sm:$0xff]
      %v754 = vld [vmem:[%s4 + $0x40] sm:$0xff]
      %v755 = vld [vmem:[%s4 + $0x48] sm:$0xff]
      %v756 = vld [vmem:[%s4 + $0x50] sm:$0xff]
      %v757 = vld [vmem:[%s4 + $0x58] sm:$0xff]
      %v758 = vld [vmem:[%s4 + $0x60] sm:$0xff]
      %v759 = vld [vmem:[%s4 + $0x68] sm:$0xff]
      %v760 = vld [vmem:[%s4 + $0x70] sm:$0xff]
      %v761 = vld [vmem:[%s4 + $0x78] sm:$0xff]
      %763 = vset.pattern.permute.xlu0 0
      %764 = vperm.xlu0 %763, %v746
      %v765 = vpop.permute.xlu0 %764
      %768 = vset.pattern.permute.xlu0 0
      %769 = vperm.xlu0 %768, %v747
      %v770 = vpop.permute.xlu0 %769
      %773 = vset.pattern.permute.xlu0 0
      %774 = vperm.xlu0 %773, %v748
      %v775 = vpop.permute.xlu0 %774
      %778 = vset.pattern.permute.xlu0 0
      %779 = vperm.xlu0 %778, %v749
      %v780 = vpop.permute.xlu0 %779
      %783 = vset.pattern.permute.xlu0 0
      %784 = vperm.xlu0 %783, %v750
      %v785 = vpop.permute.xlu0 %784
      %788 = vset.pattern.permute.xlu0 0
      %789 = vperm.xlu0 %788, %v751
      %v790 = vpop.permute.xlu0 %789
      %793 = vset.pattern.permute.xlu0 0
      %794 = vperm.xlu0 %793, %v752
      %v795 = vpop.permute.xlu0 %794
      %798 = vset.pattern.permute.xlu0 0
      %799 = vperm.xlu0 %798, %v753
      %v800 = vpop.permute.xlu0 %799
      %803 = vset.pattern.permute.xlu0 0
      %804 = vperm.xlu0 %803, %v754
      %v805 = vpop.permute.xlu0 %804
      %808 = vset.pattern.permute.xlu0 0
      %809 = vperm.xlu0 %808, %v755
      %v810 = vpop.permute.xlu0 %809
      %813 = vset.pattern.permute.xlu0 0
      %814 = vperm.xlu0 %813, %v756
      %v815 = vpop.permute.xlu0 %814
      %818 = vset.pattern.permute.xlu0 0
      %819 = vperm.xlu0 %818, %v757
      %v820 = vpop.permute.xlu0 %819
      %823 = vset.pattern.permute.xlu0 0
      %824 = vperm.xlu0 %823, %v758
      %v825 = vpop.permute.xlu0 %824
      %828 = vset.pattern.permute.xlu0 0
      %829 = vperm.xlu0 %828, %v759
      %v830 = vpop.permute.xlu0 %829
      %833 = vset.pattern.permute.xlu0 0
      %834 = vperm.xlu0 %833, %v760
      %v835 = vpop.permute.xlu0 %834
      %838 = vset.pattern.permute.xlu0 0
      %839 = vperm.xlu0 %838, %v761
      %v840 = vpop.permute.xlu0 %839
      %v858 = vunpack.c.l.b16 %v714
      %v859 = vunpack.c.l.b16 %v715
      %v860 = vunpack.c.l.b16 %v716
      %v861 = vunpack.c.l.b16 %v717
      %v862 = vunpack.c.l.b16 %v718
      %v863 = vunpack.c.l.b16 %v719
      %v864 = vunpack.c.l.b16 %v720
      %v865 = vunpack.c.l.b16 %v721
      %v866 = vunpack.c.l.b16 %v722
      %v867 = vunpack.c.l.b16 %v723
      %v868 = vunpack.c.l.b16 %v724
      %v869 = vunpack.c.l.b16 %v725
      %v870 = vunpack.c.l.b16 %v726
      %v871 = vunpack.c.l.b16 %v727
      %v872 = vunpack.c.l.b16 %v728
      %v873 = vunpack.c.l.b16 %v729
      %v874 = vpack.c.b16 %v859, %v858
      %v875 = vpack.c.b16 %v861, %v860
      %v876 = vpack.c.b16 %v863, %v862
      %v877 = vpack.c.b16 %v865, %v864
      %v878 = vpack.c.b16 %v867, %v866
      %v879 = vpack.c.b16 %v869, %v868
      %v880 = vpack.c.b16 %v871, %v870
      %v881 = vpack.c.b16 %v873, %v872
      %890 = vmatprep.subr.bf16.mxu0 %v745
      %891 = vmatpush1.bf16.msra.mxu0 %v744
      %892 = vmatprep.subr.bf16.mxu0 %v743
      %893 = vmatpush1.bf16.msra.mxu0 %v742
      %894 = vmatprep.subr.bf16.mxu0 %v741
      %895 = vmatpush1.bf16.msra.mxu0 %v740
      %896 = vmatprep.subr.bf16.mxu0 %v739
      %897 = vmatpush1.bf16.msra.mxu0 %v738
      %898 = vmatprep.subr.bf16.mxu0 %v737
      %899 = vmatpush1.bf16.msra.mxu0 %v736
      %900 = vmatprep.subr.bf16.mxu0 %v735
      %901 = vmatpush1.bf16.msra.mxu0 %v734
      %902 = vmatprep.subr.bf16.mxu0 %v733
      %903 = vmatpush1.bf16.msra.mxu0 %v732
      %904 = vmatprep.subr.bf16.mxu0 %v731
      %905 = vmatpush1.bf16.msra.mxu0 %v730
      %906 = vmatprep.subr.bf16.mxu0 0
      %907 = vmatpush2.bf16.msra.mxu0 0
      %908 = vmatprep.subr.bf16.mxu0 0
      %909 = vmatpush2.bf16.msra.mxu0 0
      %910 = vmatprep.subr.bf16.mxu0 0
      %911 = vmatpush2.bf16.msra.mxu0 0
      %912 = vmatprep.subr.bf16.mxu0 0
      %913 = vmatpush2.bf16.msra.mxu0 0
      %914 = vmatprep.subr.bf16.mxu0 0
      %915 = vmatpush2.bf16.msra.mxu0 0
      %916 = vmatprep.subr.bf16.mxu0 0
      %917 = vmatpush2.bf16.msra.mxu0 0
      %918 = vmatprep.subr.bf16.mxu0 0
      %919 = vmatpush2.bf16.msra.mxu0 0
      %920 = vmatprep.subr.bf16.mxu0 0
      %921 = vmatpush2.bf16.msra.mxu0 0
      %922 = vmatprep.mubr.bf16.mxu0 0
      %923 = vmatmul.mubr.bf16.gmra.mxu0 %v874
      %v924 = vpop.f32.mrf.mxu0
      %v925 = vadd.f32 %v765, %v924
      %v926 = vpop.f32.mrf.mxu0
      %v927 = vadd.f32 %v765, %v926
      %v928 = vpop.f32.mrf.mxu0
      %v929 = vadd.f32 %v770, %v928
      %v930 = vpop.f32.mrf.mxu0
      %v931 = vadd.f32 %v770, %v930
      %932 = vmatprep.mubr.bf16.mxu0 0
      %933 = vmatmul.mubr.bf16.gmra.mxu0 %v875
      %v934 = vpop.f32.mrf.mxu0
      %v935 = vadd.f32 %v775, %v934
      %v936 = vpop.f32.mrf.mxu0
      %v937 = vadd.f32 %v775, %v936
      %v938 = vpop.f32.mrf.mxu0
      %v939 = vadd.f32 %v780, %v938
      %v940 = vpop.f32.mrf.mxu0
      %v941 = vadd.f32 %v780, %v940
      %942 = vmatprep.mubr.bf16.mxu0 0
      %943 = vmatmul.mubr.bf16.gmra.mxu0 %v876
      %v944 = vpop.f32.mrf.mxu0
      %v945 = vadd.f32 %v785, %v944
      %v946 = vpop.f32.mrf.mxu0
      %v947 = vadd.f32 %v785, %v946
      %v948 = vpop.f32.mrf.mxu0
      %v949 = vadd.f32 %v790, %v948
      %v950 = vpop.f32.mrf.mxu0
      %v951 = vadd.f32 %v790, %v950
      %952 = vmatprep.mubr.bf16.mxu0 0
      %953 = vmatmul.mubr.bf16.gmra.mxu0 %v877
      %v954 = vpop.f32.mrf.mxu0
      %v955 = vadd.f32 %v795, %v954
      %v956 = vpop.f32.mrf.mxu0
      %v957 = vadd.f32 %v795, %v956
      %v958 = vpop.f32.mrf.mxu0
      %v959 = vadd.f32 %v800, %v958
      %v960 = vpop.f32.mrf.mxu0
      %v961 = vadd.f32 %v800, %v960
      %962 = vmatprep.mubr.bf16.mxu0 0
      %963 = vmatmul.mubr.bf16.gmra.mxu0 %v878
      %v964 = vpop.f32.mrf.mxu0
      %v965 = vadd.f32 %v805, %v964
      %v966 = vpop.f32.mrf.mxu0
      %v967 = vadd.f32 %v805, %v966
      %v968 = vpop.f32.mrf.mxu0
      %v969 = vadd.f32 %v810, %v968
      %v970 = vpop.f32.mrf.mxu0
      %v971 = vadd.f32 %v810, %v970
      %972 = vmatprep.mubr.bf16.mxu0 0
      %973 = vmatmul.mubr.bf16.gmra.mxu0 %v879
      %v974 = vpop.f32.mrf.mxu0
      %v975 = vadd.f32 %v815, %v974
      %v976 = vpop.f32.mrf.mxu0
      %v977 = vadd.f32 %v815, %v976
      %v978 = vpop.f32.mrf.mxu0
      %v979 = vadd.f32 %v820, %v978
      %v980 = vpop.f32.mrf.mxu0
      %v981 = vadd.f32 %v820, %v980
      %982 = vmatprep.mubr.bf16.mxu0 0
      %983 = vmatmul.mubr.bf16.gmra.mxu0 %v880
      %v984 = vpop.f32.mrf.mxu0
      %v985 = vadd.f32 %v825, %v984
      %v986 = vpop.f32.mrf.mxu0
      %v987 = vadd.f32 %v825, %v986
      %v988 = vpop.f32.mrf.mxu0
      %v989 = vadd.f32 %v830, %v988
      %v990 = vpop.f32.mrf.mxu0
      %v991 = vadd.f32 %v830, %v990
      %992 = vmatprep.mubr.bf16.mxu0 0
      %993 = vmatmul.mubr.bf16.gmra.mxu0 %v881
      %v994 = vpop.f32.mrf.mxu0
      %v995 = vadd.f32 %v835, %v994
      %v996 = vpop.f32.mrf.mxu0
      %v997 = vadd.f32 %v835, %v996
      %v998 = vpop.f32.mrf.mxu0
      %v999 = vadd.f32 %v840, %v998
      %v1000 = vpop.f32.mrf.mxu0
      %v1001 = vadd.f32 %v840, %v1000
      %1002 = vdwg.mxu0
      %v1003 = vmul.f32 %v925, 0.5
      %v1004 = vmul.f32 %v927, 0.5
      %v1005 = vmul.f32 %v929, 0.5
      %v1006 = vmul.f32 %v931, 0.5
      %v1007 = vmul.f32 %v935, 0.5
      %v1008 = vmul.f32 %v937, 0.5
      %v1009 = vmul.f32 %v939, 0.5
      %v1010 = vmul.f32 %v941, 0.5
      %v1011 = vmul.f32 %v945, 0.5
      %v1012 = vmul.f32 %v947, 0.5
      %v1013 = vmul.f32 %v949, 0.5
      %v1014 = vmul.f32 %v951, 0.5
      %v1015 = vmul.f32 %v955, 0.5
      %v1016 = vmul.f32 %v957, 0.5
      %v1017 = vmul.f32 %v959, 0.5
      %v1018 = vmul.f32 %v961, 0.5
      %v1019 = vmul.f32 %v965, 0.5
      %v1020 = vmul.f32 %v967, 0.5
      %v1021 = vmul.f32 %v969, 0.5
      %v1022 = vmul.f32 %v971, 0.5
      %v1023 = vmul.f32 %v975, 0.5
      %v1024 = vmul.f32 %v977, 0.5
      %v1025 = vmul.f32 %v979, 0.5
      %v1026 = vmul.f32 %v981, 0.5
      %v1027 = vmul.f32 %v985, 0.5
      %v1028 = vmul.f32 %v987, 0.5
      %v1029 = vmul.f32 %v989, 0.5
      %v1030 = vmul.f32 %v991, 0.5
      %v1031 = vmul.f32 %v995, 0.5
      %v1032 = vmul.f32 %v997, 0.5
      %v1033 = vmul.f32 %v999, 0.5
      %v1034 = vmul.f32 %v1001, 0.5
      %v1035 = vtanh.pop %v1003
      %v1036 = vtanh.pop %v1004
      %v1037 = vtanh.pop %v1005
      %v1038 = vtanh.pop %v1006
      %v1039 = vtanh.pop %v1007
      %v1040 = vtanh.pop %v1008
      %v1041 = vtanh.pop %v1009
      %v1042 = vtanh.pop %v1010
      %v1043 = vtanh.pop %v1011
      %v1044 = vtanh.pop %v1012
      %v1045 = vtanh.pop %v1013
      %v1046 = vtanh.pop %v1014
      %v1047 = vtanh.pop %v1015
      %v1048 = vtanh.pop %v1016
      %v1049 = vtanh.pop %v1017
      %v1050 = vtanh.pop %v1018
      %v1051 = vtanh.pop %v1019
      %v1052 = vtanh.pop %v1020
      %v1053 = vtanh.pop %v1021
      %v1054 = vtanh.pop %v1022
      %v1055 = vtanh.pop %v1023
      %v1056 = vtanh.pop %v1024
      %v1057 = vtanh.pop %v1025
      %v1058 = vtanh.pop %v1026
      %v1059 = vtanh.pop %v1027
      %v1060 = vtanh.pop %v1028
      %v1061 = vtanh.pop %v1029
      %v1062 = vtanh.pop %v1030
      %v1063 = vtanh.pop %v1031
      %v1064 = vtanh.pop %v1032
      %v1065 = vtanh.pop %v1033
      %v1066 = vtanh.pop %v1034
      %v1067 = vadd.f32 %v1035, 1.0
      %v1068 = vadd.f32 %v1036, 1.0
      %v1069 = vadd.f32 %v1037, 1.0
      %v1070 = vadd.f32 %v1038, 1.0
      %v1071 = vadd.f32 %v1039, 1.0
      %v1072 = vadd.f32 %v1040, 1.0
      %v1073 = vadd.f32 %v1041, 1.0
      %v1074 = vadd.f32 %v1042, 1.0
      %v1075 = vadd.f32 %v1043, 1.0
      %v1076 = vadd.f32 %v1044, 1.0
      %v1077 = vadd.f32 %v1045, 1.0
      %v1078 = vadd.f32 %v1046, 1.0
      %v1079 = vadd.f32 %v1047, 1.0
      %v1080 = vadd.f32 %v1048, 1.0
      %v1081 = vadd.f32 %v1049, 1.0
      %v1082 = vadd.f32 %v1050, 1.0
      %v1083 = vadd.f32 %v1051, 1.0
      %v1084 = vadd.f32 %v1052, 1.0
      %v1085 = vadd.f32 %v1053, 1.0
      %v1086 = vadd.f32 %v1054, 1.0
      %v1087 = vadd.f32 %v1055, 1.0
      %v1088 = vadd.f32 %v1056, 1.0
      %v1089 = vadd.f32 %v1057, 1.0
      %v1090 = vadd.f32 %v1058, 1.0
      %v1091 = vadd.f32 %v1059, 1.0
      %v1092 = vadd.f32 %v1060, 1.0
      %v1093 = vadd.f32 %v1061, 1.0
      %v1094 = vadd.f32 %v1062, 1.0
      %v1095 = vadd.f32 %v1063, 1.0
      %v1096 = vadd.f32 %v1064, 1.0
      %v1097 = vadd.f32 %v1065, 1.0
      %v1098 = vadd.f32 %v1066, 1.0
      %v1099 = vmul.f32 %v1003, %v1067
      %v1100 = vmul.f32 %v1004, %v1068
      %v1101 = vmul.f32 %v1005, %v1069
      %v1102 = vmul.f32 %v1006, %v1070
      %v1103 = vmul.f32 %v1007, %v1071
      %v1104 = vmul.f32 %v1008, %v1072
      %v1105 = vmul.f32 %v1009, %v1073
      %v1106 = vmul.f32 %v1010, %v1074
      %v1107 = vmul.f32 %v1011, %v1075
      %v1108 = vmul.f32 %v1012, %v1076
      %v1109 = vmul.f32 %v1013, %v1077
      %v1110 = vmul.f32 %v1014, %v1078
      %v1111 = vmul.f32 %v1015, %v1079
      %v1112 = vmul.f32 %v1016, %v1080
      %v1113 = vmul.f32 %v1017, %v1081
      %v1114 = vmul.f32 %v1018, %v1082
      %v1115 = vmul.f32 %v1019, %v1083
      %v1116 = vmul.f32 %v1020, %v1084
      %v1117 = vmul.f32 %v1021, %v1085
      %v1118 = vmul.f32 %v1022, %v1086
      %v1119 = vmul.f32 %v1023, %v1087
      %v1120 = vmul.f32 %v1024, %v1088
      %v1121 = vmul.f32 %v1025, %v1089
      %v1122 = vmul.f32 %v1026, %v1090
      %v1123 = vmul.f32 %v1027, %v1091
      %v1124 = vmul.f32 %v1028, %v1092
      %v1125 = vmul.f32 %v1029, %v1093
      %v1126 = vmul.f32 %v1030, %v1094
      %v1127 = vmul.f32 %v1031, %v1095
      %v1128 = vmul.f32 %v1032, %v1096
      %v1129 = vmul.f32 %v1033, %v1097
      %v1130 = vmul.f32 %v1034, %v1098
      %s1131 = scalar_lea.vmem %s3, 64
      %v1132 = vld [vmem:[%s1131] sm:$0xf]
      %v1133 = vld [vmem:[%s1131 + $0x4] sm:$0xf]
      %v1134 = vld [vmem:[%s1131 + $0x8] sm:$0xf]
      %v1135 = vld [vmem:[%s1131 + $0xc] sm:$0xf]
      %v1136 = vld [vmem:[%s1131 + $0x10] sm:$0xf]
      %v1137 = vld [vmem:[%s1131 + $0x14] sm:$0xf]
      %v1138 = vld [vmem:[%s1131 + $0x18] sm:$0xf]
      %v1139 = vld [vmem:[%s1131 + $0x1c] sm:$0xf]
      %v1140 = vld [vmem:[%s1131 + $0x20] sm:$0xf]
      %v1141 = vld [vmem:[%s1131 + $0x24] sm:$0xf]
      %v1142 = vld [vmem:[%s1131 + $0x28] sm:$0xf]
      %v1143 = vld [vmem:[%s1131 + $0x2c] sm:$0xf]
      %v1144 = vld [vmem:[%s1131 + $0x30] sm:$0xf]
      %v1145 = vld [vmem:[%s1131 + $0x34] sm:$0xf]
      %v1146 = vld [vmem:[%s1131 + $0x38] sm:$0xf]
      %v1147 = vld [vmem:[%s1131 + $0x3c] sm:$0xf]
      %v1148 = vpack.c.bf16 %v1101, %v1099
      %v1149 = vpack.c.bf16 %v1102, %v1100
      %v1150 = vpack.c.bf16 %v1105, %v1103
      %v1151 = vpack.c.bf16 %v1106, %v1104
      %v1152 = vpack.c.bf16 %v1109, %v1107
      %v1153 = vpack.c.bf16 %v1110, %v1108
      %v1154 = vpack.c.bf16 %v1113, %v1111
      %v1155 = vpack.c.bf16 %v1114, %v1112
      %v1156 = vpack.c.bf16 %v1117, %v1115
      %v1157 = vpack.c.bf16 %v1118, %v1116
      %v1158 = vpack.c.bf16 %v1121, %v1119
      %v1159 = vpack.c.bf16 %v1122, %v1120
      %v1160 = vpack.c.bf16 %v1125, %v1123
      %v1161 = vpack.c.bf16 %v1126, %v1124
      %v1162 = vpack.c.bf16 %v1129, %v1127
      %v1163 = vpack.c.bf16 %v1130, %v1128
      %s1164 = scalar_lea.vmem %s4, 128
      %v1165 = vld [vmem:[%s1164] sm:$0xff]
      %v1166 = vld [vmem:[%s1164 + $0x8] sm:$0xff]
      %v1167 = vld [vmem:[%s1164 + $0x10] sm:$0xff]
      %v1168 = vld [vmem:[%s1164 + $0x18] sm:$0xff]
      %v1169 = vld [vmem:[%s1164 + $0x20] sm:$0xff]
      %v1170 = vld [vmem:[%s1164 + $0x28] sm:$0xff]
      %v1171 = vld [vmem:[%s1164 + $0x30] sm:$0xff]
      %v1172 = vld [vmem:[%s1164 + $0x38] sm:$0xff]
      %v1173 = vld [vmem:[%s1164 + $0x40] sm:$0xff]
      %v1174 = vld [vmem:[%s1164 + $0x48] sm:$0xff]
      %v1175 = vld [vmem:[%s1164 + $0x50] sm:$0xff]
      %v1176 = vld [vmem:[%s1164 + $0x58] sm:$0xff]
      %v1177 = vld [vmem:[%s1164 + $0x60] sm:$0xff]
      %v1178 = vld [vmem:[%s1164 + $0x68] sm:$0xff]
      %v1179 = vld [vmem:[%s1164 + $0x70] sm:$0xff]
      %v1180 = vld [vmem:[%s1164 + $0x78] sm:$0xff]
      %1182 = vset.pattern.permute.xlu0 0
      %1183 = vperm.xlu0 %1182, %v1165
      %v1184 = vpop.permute.xlu0 %1183
      %1187 = vset.pattern.permute.xlu0 0
      %1188 = vperm.xlu0 %1187, %v1166
      %v1189 = vpop.permute.xlu0 %1188
      %1192 = vset.pattern.permute.xlu0 0
      %1193 = vperm.xlu0 %1192, %v1167
      %v1194 = vpop.permute.xlu0 %1193
      %1197 = vset.pattern.permute.xlu0 0
      %1198 = vperm.xlu0 %1197, %v1168
      %v1199 = vpop.permute.xlu0 %1198
      %1202 = vset.pattern.permute.xlu0 0
      %1203 = vperm.xlu0 %1202, %v1169
      %v1204 = vpop.permute.xlu0 %1203
      %1207 = vset.pattern.permute.xlu0 0
      %1208 = vperm.xlu0 %1207, %v1170
      %v1209 = vpop.permute.xlu0 %1208
      %1212 = vset.pattern.permute.xlu0 0
      %1213 = vperm.xlu0 %1212, %v1171
      %v1214 = vpop.permute.xlu0 %1213
      %1217 = vset.pattern.permute.xlu0 0
      %1218 = vperm.xlu0 %1217, %v1172
      %v1219 = vpop.permute.xlu0 %1218
      %1222 = vset.pattern.permute.xlu0 0
      %1223 = vperm.xlu0 %1222, %v1173
      %v1224 = vpop.permute.xlu0 %1223
      %1227 = vset.pattern.permute.xlu0 0
      %1228 = vperm.xlu0 %1227, %v1174
      %v1229 = vpop.permute.xlu0 %1228
      %1232 = vset.pattern.permute.xlu0 0
      %1233 = vperm.xlu0 %1232, %v1175
      %v1234 = vpop.permute.xlu0 %1233
      %1237 = vset.pattern.permute.xlu0 0
      %1238 = vperm.xlu0 %1237, %v1176
      %v1239 = vpop.permute.xlu0 %1238
      %1242 = vset.pattern.permute.xlu0 0
      %1243 = vperm.xlu0 %1242, %v1177
      %v1244 = vpop.permute.xlu0 %1243
      %1247 = vset.pattern.permute.xlu0 0
      %1248 = vperm.xlu0 %1247, %v1178
      %v1249 = vpop.permute.xlu0 %1248
      %1252 = vset.pattern.permute.xlu0 0
      %1253 = vperm.xlu0 %1252, %v1179
      %v1254 = vpop.permute.xlu0 %1253
      %1257 = vset.pattern.permute.xlu0 0
      %1258 = vperm.xlu0 %1257, %v1180
      %v1259 = vpop.permute.xlu0 %1258
      %v1277 = vunpack.c.l.b16 %v1132
      %v1278 = vunpack.c.l.b16 %v1133
      %v1279 = vunpack.c.l.b16 %v1134
      %v1280 = vunpack.c.l.b16 %v1135
      %v1281 = vunpack.c.l.b16 %v1136
      %v1282 = vunpack.c.l.b16 %v1137
      %v1283 = vunpack.c.l.b16 %v1138
      %v1284 = vunpack.c.l.b16 %v1139
      %v1285 = vunpack.c.l.b16 %v1140
      %v1286 = vunpack.c.l.b16 %v1141
      %v1287 = vunpack.c.l.b16 %v1142
      %v1288 = vunpack.c.l.b16 %v1143
      %v1289 = vunpack.c.l.b16 %v1144
      %v1290 = vunpack.c.l.b16 %v1145
      %v1291 = vunpack.c.l.b16 %v1146
      %v1292 = vunpack.c.l.b16 %v1147
      %v1293 = vpack.c.b16 %v1278, %v1277
      %v1294 = vpack.c.b16 %v1280, %v1279
      %v1295 = vpack.c.b16 %v1282, %v1281
      %v1296 = vpack.c.b16 %v1284, %v1283
      %v1297 = vpack.c.b16 %v1286, %v1285
      %v1298 = vpack.c.b16 %v1288, %v1287
      %v1299 = vpack.c.b16 %v1290, %v1289
      %v1300 = vpack.c.b16 %v1292, %v1291
      %1309 = vmatprep.subr.bf16.mxu0 %v1163
      %1310 = vmatpush1.bf16.msra.mxu0 %v1162
      %1311 = vmatprep.subr.bf16.mxu0 %v1161
      %1312 = vmatpush1.bf16.msra.mxu0 %v1160
      %1313 = vmatprep.subr.bf16.mxu0 %v1159
      %1314 = vmatpush1.bf16.msra.mxu0 %v1158
      %1315 = vmatprep.subr.bf16.mxu0 %v1157
      %1316 = vmatpush1.bf16.msra.mxu0 %v1156
      %1317 = vmatprep.subr.bf16.mxu0 %v1155
      %1318 = vmatpush1.bf16.msra.mxu0 %v1154
      %1319 = vmatprep.subr.bf16.mxu0 %v1153
      %1320 = vmatpush1.bf16.msra.mxu0 %v1152
      %1321 = vmatprep.subr.bf16.mxu0 %v1151
      %1322 = vmatpush1.bf16.msra.mxu0 %v1150
      %1323 = vmatprep.subr.bf16.mxu0 %v1149
      %1324 = vmatpush1.bf16.msra.mxu0 %v1148
      %1325 = vmatprep.subr.bf16.mxu0 0
      %1326 = vmatpush2.bf16.msra.mxu0 0
      %1327 = vmatprep.subr.bf16.mxu0 0
      %1328 = vmatpush2.bf16.msra.mxu0 0
      %1329 = vmatprep.subr.bf16.mxu0 0
      %1330 = vmatpush2.bf16.msra.mxu0 0
      %1331 = vmatprep.subr.bf16.mxu0 0
      %1332 = vmatpush2.bf16.msra.mxu0 0
      %1333 = vmatprep.subr.bf16.mxu0 0
      %1334 = vmatpush2.bf16.msra.mxu0 0
      %1335 = vmatprep.subr.bf16.mxu0 0
      %1336 = vmatpush2.bf16.msra.mxu0 0
      %1337 = vmatprep.subr.bf16.mxu0 0
      %1338 = vmatpush2.bf16.msra.mxu0 0
      %1339 = vmatprep.subr.bf16.mxu0 0
      %1340 = vmatpush2.bf16.msra.mxu0 0
      %1341 = vmatprep.mubr.bf16.mxu0 0
      %1342 = vmatmul.mubr.bf16.gmra.mxu0 %v1293
      %v1343 = vpop.f32.mrf.mxu0
      %v1344 = vadd.f32 %v1184, %v1343
      %v1345 = vpop.f32.mrf.mxu0
      %v1346 = vadd.f32 %v1184, %v1345
      %v1347 = vpop.f32.mrf.mxu0
      %v1348 = vadd.f32 %v1189, %v1347
      %v1349 = vpop.f32.mrf.mxu0
      %v1350 = vadd.f32 %v1189, %v1349
      %1351 = vmatprep.mubr.bf16.mxu0 0
      %1352 = vmatmul.mubr.bf16.gmra.mxu0 %v1294
      %v1353 = vpop.f32.mrf.mxu0
      %v1354 = vadd.f32 %v1194, %v1353
      %v1355 = vpop.f32.mrf.mxu0
      %v1356 = vadd.f32 %v1194, %v1355
      %v1357 = vpop.f32.mrf.mxu0
      %v1358 = vadd.f32 %v1199, %v1357
      %v1359 = vpop.f32.mrf.mxu0
      %v1360 = vadd.f32 %v1199, %v1359
      %1361 = vmatprep.mubr.bf16.mxu0 0
      %1362 = vmatmul.mubr.bf16.gmra.mxu0 %v1295
      %v1363 = vpop.f32.mrf.mxu0
      %v1364 = vadd.f32 %v1204, %v1363
      %v1365 = vpop.f32.mrf.mxu0
      %v1366 = vadd.f32 %v1204, %v1365
      %v1367 = vpop.f32.mrf.mxu0
      %v1368 = vadd.f32 %v1209, %v1367
      %v1369 = vpop.f32.mrf.mxu0
      %v1370 = vadd.f32 %v1209, %v1369
      %1371 = vmatprep.mubr.bf16.mxu0 0
      %1372 = vmatmul.mubr.bf16.gmra.mxu0 %v1296
      %v1373 = vpop.f32.mrf.mxu0
      %v1374 = vadd.f32 %v1214, %v1373
      %v1375 = vpop.f32.mrf.mxu0
      %v1376 = vadd.f32 %v1214, %v1375
      %v1377 = vpop.f32.mrf.mxu0
      %v1378 = vadd.f32 %v1219, %v1377
      %v1379 = vpop.f32.mrf.mxu0
      %v1380 = vadd.f32 %v1219, %v1379
      %1381 = vmatprep.mubr.bf16.mxu0 0
      %1382 = vmatmul.mubr.bf16.gmra.mxu0 %v1297
      %v1383 = vpop.f32.mrf.mxu0
      %v1384 = vadd.f32 %v1224, %v1383
      %v1385 = vpop.f32.mrf.mxu0
      %v1386 = vadd.f32 %v1224, %v1385
      %v1387 = vpop.f32.mrf.mxu0
      %v1388 = vadd.f32 %v1229, %v1387
      %v1389 = vpop.f32.mrf.mxu0
      %v1390 = vadd.f32 %v1229, %v1389
      %1391 = vmatprep.mubr.bf16.mxu0 0
      %1392 = vmatmul.mubr.bf16.gmra.mxu0 %v1298
      %v1393 = vpop.f32.mrf.mxu0
      %v1394 = vadd.f32 %v1234, %v1393
      %v1395 = vpop.f32.mrf.mxu0
      %v1396 = vadd.f32 %v1234, %v1395
      %v1397 = vpop.f32.mrf.mxu0
      %v1398 = vadd.f32 %v1239, %v1397
      %v1399 = vpop.f32.mrf.mxu0
      %v1400 = vadd.f32 %v1239, %v1399
      %1401 = vmatprep.mubr.bf16.mxu0 0
      %1402 = vmatmul.mubr.bf16.gmra.mxu0 %v1299
      %v1403 = vpop.f32.mrf.mxu0
      %v1404 = vadd.f32 %v1244, %v1403
      %v1405 = vpop.f32.mrf.mxu0
      %v1406 = vadd.f32 %v1244, %v1405
      %v1407 = vpop.f32.mrf.mxu0
      %v1408 = vadd.f32 %v1249, %v1407
      %v1409 = vpop.f32.mrf.mxu0
      %v1410 = vadd.f32 %v1249, %v1409
      %1411 = vmatprep.mubr.bf16.mxu0 0
      %1412 = vmatmul.mubr.bf16.gmra.mxu0 %v1300
      %v1413 = vpop.f32.mrf.mxu0
      %v1414 = vadd.f32 %v1254, %v1413
      %v1415 = vpop.f32.mrf.mxu0
      %v1416 = vadd.f32 %v1254, %v1415
      %v1417 = vpop.f32.mrf.mxu0
      %v1418 = vadd.f32 %v1259, %v1417
      %v1419 = vpop.f32.mrf.mxu0
      %v1420 = vadd.f32 %v1259, %v1419
      %1421 = vdwg.mxu0
      %v1422 = vmul.f32 %v1344, 0.5
      %v1423 = vmul.f32 %v1346, 0.5
      %v1424 = vmul.f32 %v1348, 0.5
      %v1425 = vmul.f32 %v1350, 0.5
      %v1426 = vmul.f32 %v1354, 0.5
      %v1427 = vmul.f32 %v1356, 0.5
      %v1428 = vmul.f32 %v1358, 0.5
      %v1429 = vmul.f32 %v1360, 0.5
      %v1430 = vmul.f32 %v1364, 0.5
      %v1431 = vmul.f32 %v1366, 0.5
      %v1432 = vmul.f32 %v1368, 0.5
      %v1433 = vmul.f32 %v1370, 0.5
      %v1434 = vmul.f32 %v1374, 0.5
      %v1435 = vmul.f32 %v1376, 0.5
      %v1436 = vmul.f32 %v1378, 0.5
      %v1437 = vmul.f32 %v1380, 0.5
      %v1438 = vmul.f32 %v1384, 0.5
      %v1439 = vmul.f32 %v1386, 0.5
      %v1440 = vmul.f32 %v1388, 0.5
      %v1441 = vmul.f32 %v1390, 0.5
      %v1442 = vmul.f32 %v1394, 0.5
      %v1443 = vmul.f32 %v1396, 0.5
      %v1444 = vmul.f32 %v1398, 0.5
      %v1445 = vmul.f32 %v1400, 0.5
      %v1446 = vmul.f32 %v1404, 0.5
      %v1447 = vmul.f32 %v1406, 0.5
      %v1448 = vmul.f32 %v1408, 0.5
      %v1449 = vmul.f32 %v1410, 0.5
      %v1450 = vmul.f32 %v1414, 0.5
      %v1451 = vmul.f32 %v1416, 0.5
      %v1452 = vmul.f32 %v1418, 0.5
      %v1453 = vmul.f32 %v1420, 0.5
      %v1454 = vtanh.pop %v1422
      %v1455 = vtanh.pop %v1423
      %v1456 = vtanh.pop %v1424
      %v1457 = vtanh.pop %v1425
      %v1458 = vtanh.pop %v1426
      %v1459 = vtanh.pop %v1427
      %v1460 = vtanh.pop %v1428
      %v1461 = vtanh.pop %v1429
      %v1462 = vtanh.pop %v1430
      %v1463 = vtanh.pop %v1431
      %v1464 = vtanh.pop %v1432
      %v1465 = vtanh.pop %v1433
      %v1466 = vtanh.pop %v1434
      %v1467 = vtanh.pop %v1435
      %v1468 = vtanh.pop %v1436
      %v1469 = vtanh.pop %v1437
      %v1470 = vtanh.pop %v1438
      %v1471 = vtanh.pop %v1439
      %v1472 = vtanh.pop %v1440
      %v1473 = vtanh.pop %v1441
      %v1474 = vtanh.pop %v1442
      %v1475 = vtanh.pop %v1443
      %v1476 = vtanh.pop %v1444
      %v1477 = vtanh.pop %v1445
      %v1478 = vtanh.pop %v1446
      %v1479 = vtanh.pop %v1447
      %v1480 = vtanh.pop %v1448
      %v1481 = vtanh.pop %v1449
      %v1482 = vtanh.pop %v1450
      %v1483 = vtanh.pop %v1451
      %v1484 = vtanh.pop %v1452
      %v1485 = vtanh.pop %v1453
      %v1486 = vadd.f32 %v1454, 1.0
      %v1487 = vadd.f32 %v1455, 1.0
      %v1488 = vadd.f32 %v1456, 1.0
      %v1489 = vadd.f32 %v1457, 1.0
      %v1490 = vadd.f32 %v1458, 1.0
      %v1491 = vadd.f32 %v1459, 1.0
      %v1492 = vadd.f32 %v1460, 1.0
      %v1493 = vadd.f32 %v1461, 1.0
      %v1494 = vadd.f32 %v1462, 1.0
      %v1495 = vadd.f32 %v1463, 1.0
      %v1496 = vadd.f32 %v1464, 1.0
      %v1497 = vadd.f32 %v1465, 1.0
      %v1498 = vadd.f32 %v1466, 1.0
      %v1499 = vadd.f32 %v1467, 1.0
      %v1500 = vadd.f32 %v1468, 1.0
      %v1501 = vadd.f32 %v1469, 1.0
      %v1502 = vadd.f32 %v1470, 1.0
      %v1503 = vadd.f32 %v1471, 1.0
      %v1504 = vadd.f32 %v1472, 1.0
      %v1505 = vadd.f32 %v1473, 1.0
      %v1506 = vadd.f32 %v1474, 1.0
      %v1507 = vadd.f32 %v1475, 1.0
      %v1508 = vadd.f32 %v1476, 1.0
      %v1509 = vadd.f32 %v1477, 1.0
      %v1510 = vadd.f32 %v1478, 1.0
      %v1511 = vadd.f32 %v1479, 1.0
      %v1512 = vadd.f32 %v1480, 1.0
      %v1513 = vadd.f32 %v1481, 1.0
      %v1514 = vadd.f32 %v1482, 1.0
      %v1515 = vadd.f32 %v1483, 1.0
      %v1516 = vadd.f32 %v1484, 1.0
      %v1517 = vadd.f32 %v1485, 1.0
      %v1518 = vmul.f32 %v1422, %v1486
      %v1519 = vmul.f32 %v1423, %v1487
      %v1520 = vmul.f32 %v1424, %v1488
      %v1521 = vmul.f32 %v1425, %v1489
      %v1522 = vmul.f32 %v1426, %v1490
      %v1523 = vmul.f32 %v1427, %v1491
      %v1524 = vmul.f32 %v1428, %v1492
      %v1525 = vmul.f32 %v1429, %v1493
      %v1526 = vmul.f32 %v1430, %v1494
      %v1527 = vmul.f32 %v1431, %v1495
      %v1528 = vmul.f32 %v1432, %v1496
      %v1529 = vmul.f32 %v1433, %v1497
      %v1530 = vmul.f32 %v1434, %v1498
      %v1531 = vmul.f32 %v1435, %v1499
      %v1532 = vmul.f32 %v1436, %v1500
      %v1533 = vmul.f32 %v1437, %v1501
      %v1534 = vmul.f32 %v1438, %v1502
      %v1535 = vmul.f32 %v1439, %v1503
      %v1536 = vmul.f32 %v1440, %v1504
      %v1537 = vmul.f32 %v1441, %v1505
      %v1538 = vmul.f32 %v1442, %v1506
      %v1539 = vmul.f32 %v1443, %v1507
      %v1540 = vmul.f32 %v1444, %v1508
      %v1541 = vmul.f32 %v1445, %v1509
      %v1542 = vmul.f32 %v1446, %v1510
      %v1543 = vmul.f32 %v1447, %v1511
      %v1544 = vmul.f32 %v1448, %v1512
      %v1545 = vmul.f32 %v1449, %v1513
      %v1546 = vmul.f32 %v1450, %v1514
      %v1547 = vmul.f32 %v1451, %v1515
      %v1548 = vmul.f32 %v1452, %v1516
      %v1549 = vmul.f32 %v1453, %v1517
      %s1550 = scalar_lea.vmem %s3, 128
      %v1551 = vld [vmem:[%s1550] sm:$0xf]
      %v1552 = vld [vmem:[%s1550 + $0x4] sm:$0xf]
      %v1553 = vld [vmem:[%s1550 + $0x8] sm:$0xf]
      %v1554 = vld [vmem:[%s1550 + $0xc] sm:$0xf]
      %v1555 = vld [vmem:[%s1550 + $0x10] sm:$0xf]
      %v1556 = vld [vmem:[%s1550 + $0x14] sm:$0xf]
      %v1557 = vld [vmem:[%s1550 + $0x18] sm:$0xf]
      %v1558 = vld [vmem:[%s1550 + $0x1c] sm:$0xf]
      %v1559 = vld [vmem:[%s1550 + $0x20] sm:$0xf]
      %v1560 = vld [vmem:[%s1550 + $0x24] sm:$0xf]
      %v1561 = vld [vmem:[%s1550 + $0x28] sm:$0xf]
      %v1562 = vld [vmem:[%s1550 + $0x2c] sm:$0xf]
      %v1563 = vld [vmem:[%s1550 + $0x30] sm:$0xf]
      %v1564 = vld [vmem:[%s1550 + $0x34] sm:$0xf]
      %v1565 = vld [vmem:[%s1550 + $0x38] sm:$0xf]
      %v1566 = vld [vmem:[%s1550 + $0x3c] sm:$0xf]
      %v1567 = vpack.c.bf16 %v1520, %v1518
      %v1568 = vpack.c.bf16 %v1521, %v1519
      %v1569 = vpack.c.bf16 %v1524, %v1522
      %v1570 = vpack.c.bf16 %v1525, %v1523
      %v1571 = vpack.c.bf16 %v1528, %v1526
      %v1572 = vpack.c.bf16 %v1529, %v1527
      %v1573 = vpack.c.bf16 %v1532, %v1530
      %v1574 = vpack.c.bf16 %v1533, %v1531
      %v1575 = vpack.c.bf16 %v1536, %v1534
      %v1576 = vpack.c.bf16 %v1537, %v1535
      %v1577 = vpack.c.bf16 %v1540, %v1538
      %v1578 = vpack.c.bf16 %v1541, %v1539
      %v1579 = vpack.c.bf16 %v1544, %v1542
      %v1580 = vpack.c.bf16 %v1545, %v1543
      %v1581 = vpack.c.bf16 %v1548, %v1546
      %v1582 = vpack.c.bf16 %v1549, %v1547
      %s1583 = scalar_lea.vmem %s4, 256
      %v1584 = vld [vmem:[%s1583] sm:$0xff]
      %v1585 = vld [vmem:[%s1583 + $0x8] sm:$0xff]
      %v1586 = vld [vmem:[%s1583 + $0x10] sm:$0xff]
      %v1587 = vld [vmem:[%s1583 + $0x18] sm:$0xff]
      %v1588 = vld [vmem:[%s1583 + $0x20] sm:$0xff]
      %v1589 = vld [vmem:[%s1583 + $0x28] sm:$0xff]
      %v1590 = vld [vmem:[%s1583 + $0x30] sm:$0xff]
      %v1591 = vld [vmem:[%s1583 + $0x38] sm:$0xff]
      %v1592 = vld [vmem:[%s1583 + $0x40] sm:$0xff]
      %v1593 = vld [vmem:[%s1583 + $0x48] sm:$0xff]
      %v1594 = vld [vmem:[%s1583 + $0x50] sm:$0xff]
      %v1595 = vld [vmem:[%s1583 + $0x58] sm:$0xff]
      %v1596 = vld [vmem:[%s1583 + $0x60] sm:$0xff]
      %v1597 = vld [vmem:[%s1583 + $0x68] sm:$0xff]
      %v1598 = vld [vmem:[%s1583 + $0x70] sm:$0xff]
      %v1599 = vld [vmem:[%s1583 + $0x78] sm:$0xff]
      %1601 = vset.pattern.permute.xlu0 0
      %1602 = vperm.xlu0 %1601, %v1584
      %v1603 = vpop.permute.xlu0 %1602
      %1606 = vset.pattern.permute.xlu0 0
      %1607 = vperm.xlu0 %1606, %v1585
      %v1608 = vpop.permute.xlu0 %1607
      %1611 = vset.pattern.permute.xlu0 0
      %1612 = vperm.xlu0 %1611, %v1586
      %v1613 = vpop.permute.xlu0 %1612
      %1616 = vset.pattern.permute.xlu0 0
      %1617 = vperm.xlu0 %1616, %v1587
      %v1618 = vpop.permute.xlu0 %1617
      %1621 = vset.pattern.permute.xlu0 0
      %1622 = vperm.xlu0 %1621, %v1588
      %v1623 = vpop.permute.xlu0 %1622
      %1626 = vset.pattern.permute.xlu0 0
      %1627 = vperm.xlu0 %1626, %v1589
      %v1628 = vpop.permute.xlu0 %1627
      %1631 = vset.pattern.permute.xlu0 0
      %1632 = vperm.xlu0 %1631, %v1590
      %v1633 = vpop.permute.xlu0 %1632
      %1636 = vset.pattern.permute.xlu0 0
      %1637 = vperm.xlu0 %1636, %v1591
      %v1638 = vpop.permute.xlu0 %1637
      %1641 = vset.pattern.permute.xlu0 0
      %1642 = vperm.xlu0 %1641, %v1592
      %v1643 = vpop.permute.xlu0 %1642
      %1646 = vset.pattern.permute.xlu0 0
      %1647 = vperm.xlu0 %1646, %v1593
      %v1648 = vpop.permute.xlu0 %1647
      %1651 = vset.pattern.permute.xlu0 0
      %1652 = vperm.xlu0 %1651, %v1594
      %v1653 = vpop.permute.xlu0 %1652
      %1656 = vset.pattern.permute.xlu0 0
      %1657 = vperm.xlu0 %1656, %v1595
      %v1658 = vpop.permute.xlu0 %1657
      %1661 = vset.pattern.permute.xlu0 0
      %1662 = vperm.xlu0 %1661, %v1596
      %v1663 = vpop.permute.xlu0 %1662
      %1666 = vset.pattern.permute.xlu0 0
      %1667 = vperm.xlu0 %1666, %v1597
      %v1668 = vpop.permute.xlu0 %1667
      %1671 = vset.pattern.permute.xlu0 0
      %1672 = vperm.xlu0 %1671, %v1598
      %v1673 = vpop.permute.xlu0 %1672
      %1676 = vset.pattern.permute.xlu0 0
      %1677 = vperm.xlu0 %1676, %v1599
      %v1678 = vpop.permute.xlu0 %1677
      %v1696 = vunpack.c.l.b16 %v1551
      %v1697 = vunpack.c.l.b16 %v1552
      %v1698 = vunpack.c.l.b16 %v1553
      %v1699 = vunpack.c.l.b16 %v1554
      %v1700 = vunpack.c.l.b16 %v1555
      %v1701 = vunpack.c.l.b16 %v1556
      %v1702 = vunpack.c.l.b16 %v1557
      %v1703 = vunpack.c.l.b16 %v1558
      %v1704 = vunpack.c.l.b16 %v1559
      %v1705 = vunpack.c.l.b16 %v1560
      %v1706 = vunpack.c.l.b16 %v1561
      %v1707 = vunpack.c.l.b16 %v1562
      %v1708 = vunpack.c.l.b16 %v1563
      %v1709 = vunpack.c.l.b16 %v1564
      %v1710 = vunpack.c.l.b16 %v1565
      %v1711 = vunpack.c.l.b16 %v1566
      %v1712 = vpack.c.b16 %v1697, %v1696
      %v1713 = vpack.c.b16 %v1699, %v1698
      %v1714 = vpack.c.b16 %v1701, %v1700
      %v1715 = vpack.c.b16 %v1703, %v1702
      %v1716 = vpack.c.b16 %v1705, %v1704
      %v1717 = vpack.c.b16 %v1707, %v1706
      %v1718 = vpack.c.b16 %v1709, %v1708
      %v1719 = vpack.c.b16 %v1711, %v1710
      %1728 = vmatprep.subr.bf16.mxu0 %v1582
      %1729 = vmatpush1.bf16.msra.mxu0 %v1581
      %1730 = vmatprep.subr.bf16.mxu0 %v1580
      %1731 = vmatpush1.bf16.msra.mxu0 %v1579
      %1732 = vmatprep.subr.bf16.mxu0 %v1578
      %1733 = vmatpush1.bf16.msra.mxu0 %v1577
      %1734 = vmatprep.subr.bf16.mxu0 %v1576
      %1735 = vmatpush1.bf16.msra.mxu0 %v1575
      %1736 = vmatprep.subr.bf16.mxu0 %v1574
      %1737 = vmatpush1.bf16.msra.mxu0 %v1573
      %1738 = vmatprep.subr.bf16.mxu0 %v1572
      %1739 = vmatpush1.bf16.msra.mxu0 %v1571
      %1740 = vmatprep.subr.bf16.mxu0 %v1570
      %1741 = vmatpush1.bf16.msra.mxu0 %v1569
      %1742 = vmatprep.subr.bf16.mxu0 %v1568
      %1743 = vmatpush1.bf16.msra.mxu0 %v1567
      %1744 = vmatprep.subr.bf16.mxu0 0
      %1745 = vmatpush2.bf16.msra.mxu0 0
      %1746 = vmatprep.subr.bf16.mxu0 0
      %1747 = vmatpush2.bf16.msra.mxu0 0
      %1748 = vmatprep.subr.bf16.mxu0 0
      %1749 = vmatpush2.bf16.msra.mxu0 0
      %1750 = vmatprep.subr.bf16.mxu0 0
      %1751 = vmatpush2.bf16.msra.mxu0 0
      %1752 = vmatprep.subr.bf16.mxu0 0
      %1753 = vmatpush2.bf16.msra.mxu0 0
      %1754 = vmatprep.subr.bf16.mxu0 0
      %1755 = vmatpush2.bf16.msra.mxu0 0
      %1756 = vmatprep.subr.bf16.mxu0 0
      %1757 = vmatpush2.bf16.msra.mxu0 0
      %1758 = vmatprep.subr.bf16.mxu0 0
      %1759 = vmatpush2.bf16.msra.mxu0 0
      %1760 = vmatprep.mubr.bf16.mxu0 0
      %1761 = vmatmul.mubr.bf16.gmra.mxu0 %v1712
      %v1762 = vpop.f32.mrf.mxu0
      %v1763 = vadd.f32 %v1603, %v1762
      %v1764 = vpop.f32.mrf.mxu0
      %v1765 = vadd.f32 %v1603, %v1764
      %v1766 = vpop.f32.mrf.mxu0
      %v1767 = vadd.f32 %v1608, %v1766
      %v1768 = vpop.f32.mrf.mxu0
      %v1769 = vadd.f32 %v1608, %v1768
      %1770 = vmatprep.mubr.bf16.mxu0 0
      %1771 = vmatmul.mubr.bf16.gmra.mxu0 %v1713
      %v1772 = vpop.f32.mrf.mxu0
      %v1773 = vadd.f32 %v1613, %v1772
      %v1774 = vpop.f32.mrf.mxu0
      %v1775 = vadd.f32 %v1613, %v1774
      %v1776 = vpop.f32.mrf.mxu0
      %v1777 = vadd.f32 %v1618, %v1776
      %v1778 = vpop.f32.mrf.mxu0
      %v1779 = vadd.f32 %v1618, %v1778
      %1780 = vmatprep.mubr.bf16.mxu0 0
      %1781 = vmatmul.mubr.bf16.gmra.mxu0 %v1714
      %v1782 = vpop.f32.mrf.mxu0
      %v1783 = vadd.f32 %v1623, %v1782
      %v1784 = vpop.f32.mrf.mxu0
      %v1785 = vadd.f32 %v1623, %v1784
      %v1786 = vpop.f32.mrf.mxu0
      %v1787 = vadd.f32 %v1628, %v1786
      %v1788 = vpop.f32.mrf.mxu0
      %v1789 = vadd.f32 %v1628, %v1788
      %1790 = vmatprep.mubr.bf16.mxu0 0
      %1791 = vmatmul.mubr.bf16.gmra.mxu0 %v1715
      %v1792 = vpop.f32.mrf.mxu0
      %v1793 = vadd.f32 %v1633, %v1792
      %v1794 = vpop.f32.mrf.mxu0
      %v1795 = vadd.f32 %v1633, %v1794
      %v1796 = vpop.f32.mrf.mxu0
      %v1797 = vadd.f32 %v1638, %v1796
      %v1798 = vpop.f32.mrf.mxu0
      %v1799 = vadd.f32 %v1638, %v1798
      %1800 = vmatprep.mubr.bf16.mxu0 0
      %1801 = vmatmul.mubr.bf16.gmra.mxu0 %v1716
      %v1802 = vpop.f32.mrf.mxu0
      %v1803 = vadd.f32 %v1643, %v1802
      %v1804 = vpop.f32.mrf.mxu0
      %v1805 = vadd.f32 %v1643, %v1804
      %v1806 = vpop.f32.mrf.mxu0
      %v1807 = vadd.f32 %v1648, %v1806
      %v1808 = vpop.f32.mrf.mxu0
      %v1809 = vadd.f32 %v1648, %v1808
      %1810 = vmatprep.mubr.bf16.mxu0 0
      %1811 = vmatmul.mubr.bf16.gmra.mxu0 %v1717
      %v1812 = vpop.f32.mrf.mxu0
      %v1813 = vadd.f32 %v1653, %v1812
      %v1814 = vpop.f32.mrf.mxu0
      %v1815 = vadd.f32 %v1653, %v1814
      %v1816 = vpop.f32.mrf.mxu0
      %v1817 = vadd.f32 %v1658, %v1816
      %v1818 = vpop.f32.mrf.mxu0
      %v1819 = vadd.f32 %v1658, %v1818
      %1820 = vmatprep.mubr.bf16.mxu0 0
      %1821 = vmatmul.mubr.bf16.gmra.mxu0 %v1718
      %v1822 = vpop.f32.mrf.mxu0
      %v1823 = vadd.f32 %v1663, %v1822
      %v1824 = vpop.f32.mrf.mxu0
      %v1825 = vadd.f32 %v1663, %v1824
      %v1826 = vpop.f32.mrf.mxu0
      %v1827 = vadd.f32 %v1668, %v1826
      %v1828 = vpop.f32.mrf.mxu0
      %v1829 = vadd.f32 %v1668, %v1828
      %1830 = vmatprep.mubr.bf16.mxu0 0
      %1831 = vmatmul.mubr.bf16.gmra.mxu0 %v1719
      %v1832 = vpop.f32.mrf.mxu0
      %v1833 = vadd.f32 %v1673, %v1832
      %v1834 = vpop.f32.mrf.mxu0
      %v1835 = vadd.f32 %v1673, %v1834
      %v1836 = vpop.f32.mrf.mxu0
      %v1837 = vadd.f32 %v1678, %v1836
      %v1838 = vpop.f32.mrf.mxu0
      %v1839 = vadd.f32 %v1678, %v1838
      %1840 = vdwg.mxu0
      %v1841 = vmul.f32 %v1763, 0.5
      %v1842 = vmul.f32 %v1765, 0.5
      %v1843 = vmul.f32 %v1767, 0.5
      %v1844 = vmul.f32 %v1769, 0.5
      %v1845 = vmul.f32 %v1773, 0.5
      %v1846 = vmul.f32 %v1775, 0.5
      %v1847 = vmul.f32 %v1777, 0.5
      %v1848 = vmul.f32 %v1779, 0.5
      %v1849 = vmul.f32 %v1783, 0.5
      %v1850 = vmul.f32 %v1785, 0.5
      %v1851 = vmul.f32 %v1787, 0.5
      %v1852 = vmul.f32 %v1789, 0.5
      %v1853 = vmul.f32 %v1793, 0.5
      %v1854 = vmul.f32 %v1795, 0.5
      %v1855 = vmul.f32 %v1797, 0.5
      %v1856 = vmul.f32 %v1799, 0.5
      %v1857 = vmul.f32 %v1803, 0.5
      %v1858 = vmul.f32 %v1805, 0.5
      %v1859 = vmul.f32 %v1807, 0.5
      %v1860 = vmul.f32 %v1809, 0.5
      %v1861 = vmul.f32 %v1813, 0.5
      %v1862 = vmul.f32 %v1815, 0.5
      %v1863 = vmul.f32 %v1817, 0.5
      %v1864 = vmul.f32 %v1819, 0.5
      %v1865 = vmul.f32 %v1823, 0.5
      %v1866 = vmul.f32 %v1825, 0.5
      %v1867 = vmul.f32 %v1827, 0.5
      %v1868 = vmul.f32 %v1829, 0.5
      %v1869 = vmul.f32 %v1833, 0.5
      %v1870 = vmul.f32 %v1835, 0.5
      %v1871 = vmul.f32 %v1837, 0.5
      %v1872 = vmul.f32 %v1839, 0.5
      %v1873 = vtanh.pop %v1841
      %v1874 = vtanh.pop %v1842
      %v1875 = vtanh.pop %v1843
      %v1876 = vtanh.pop %v1844
      %v1877 = vtanh.pop %v1845
      %v1878 = vtanh.pop %v1846
      %v1879 = vtanh.pop %v1847
      %v1880 = vtanh.pop %v1848
      %v1881 = vtanh.pop %v1849
      %v1882 = vtanh.pop %v1850
      %v1883 = vtanh.pop %v1851
      %v1884 = vtanh.pop %v1852
      %v1885 = vtanh.pop %v1853
      %v1886 = vtanh.pop %v1854
      %v1887 = vtanh.pop %v1855
      %v1888 = vtanh.pop %v1856
      %v1889 = vtanh.pop %v1857
      %v1890 = vtanh.pop %v1858
      %v1891 = vtanh.pop %v1859
      %v1892 = vtanh.pop %v1860
      %v1893 = vtanh.pop %v1861
      %v1894 = vtanh.pop %v1862
      %v1895 = vtanh.pop %v1863
      %v1896 = vtanh.pop %v1864
      %v1897 = vtanh.pop %v1865
      %v1898 = vtanh.pop %v1866
      %v1899 = vtanh.pop %v1867
      %v1900 = vtanh.pop %v1868
      %v1901 = vtanh.pop %v1869
      %v1902 = vtanh.pop %v1870
      %v1903 = vtanh.pop %v1871
      %v1904 = vtanh.pop %v1872
      %v1905 = vadd.f32 %v1873, 1.0
      %v1906 = vadd.f32 %v1874, 1.0
      %v1907 = vadd.f32 %v1875, 1.0
      %v1908 = vadd.f32 %v1876, 1.0
      %v1909 = vadd.f32 %v1877, 1.0
      %v1910 = vadd.f32 %v1878, 1.0
      %v1911 = vadd.f32 %v1879, 1.0
      %v1912 = vadd.f32 %v1880, 1.0
      %v1913 = vadd.f32 %v1881, 1.0
      %v1914 = vadd.f32 %v1882, 1.0
      %v1915 = vadd.f32 %v1883, 1.0
      %v1916 = vadd.f32 %v1884, 1.0
      %v1917 = vadd.f32 %v1885, 1.0
      %v1918 = vadd.f32 %v1886, 1.0
      %v1919 = vadd.f32 %v1887, 1.0
      %v1920 = vadd.f32 %v1888, 1.0
      %v1921 = vadd.f32 %v1889, 1.0
      %v1922 = vadd.f32 %v1890, 1.0
      %v1923 = vadd.f32 %v1891, 1.0
      %v1924 = vadd.f32 %v1892, 1.0
      %v1925 = vadd.f32 %v1893, 1.0
      %v1926 = vadd.f32 %v1894, 1.0
      %v1927 = vadd.f32 %v1895, 1.0
      %v1928 = vadd.f32 %v1896, 1.0
      %v1929 = vadd.f32 %v1897, 1.0
      %v1930 = vadd.f32 %v1898, 1.0
      %v1931 = vadd.f32 %v1899, 1.0
      %v1932 = vadd.f32 %v1900, 1.0
      %v1933 = vadd.f32 %v1901, 1.0
      %v1934 = vadd.f32 %v1902, 1.0
      %v1935 = vadd.f32 %v1903, 1.0
      %v1936 = vadd.f32 %v1904, 1.0
      %v1937 = vmul.f32 %v1841, %v1905
      %v1938 = vmul.f32 %v1842, %v1906
      %v1939 = vmul.f32 %v1843, %v1907
      %v1940 = vmul.f32 %v1844, %v1908
      %v1941 = vmul.f32 %v1845, %v1909
      %v1942 = vmul.f32 %v1846, %v1910
      %v1943 = vmul.f32 %v1847, %v1911
      %v1944 = vmul.f32 %v1848, %v1912
      %v1945 = vmul.f32 %v1849, %v1913
      %v1946 = vmul.f32 %v1850, %v1914
      %v1947 = vmul.f32 %v1851, %v1915
      %v1948 = vmul.f32 %v1852, %v1916
      %v1949 = vmul.f32 %v1853, %v1917
      %v1950 = vmul.f32 %v1854, %v1918
      %v1951 = vmul.f32 %v1855, %v1919
      %v1952 = vmul.f32 %v1856, %v1920
      %v1953 = vmul.f32 %v1857, %v1921
      %v1954 = vmul.f32 %v1858, %v1922
      %v1955 = vmul.f32 %v1859, %v1923
      %v1956 = vmul.f32 %v1860, %v1924
      %v1957 = vmul.f32 %v1861, %v1925
      %v1958 = vmul.f32 %v1862, %v1926
      %v1959 = vmul.f32 %v1863, %v1927
      %v1960 = vmul.f32 %v1864, %v1928
      %v1961 = vmul.f32 %v1865, %v1929
      %v1962 = vmul.f32 %v1866, %v1930
      %v1963 = vmul.f32 %v1867, %v1931
      %v1964 = vmul.f32 %v1868, %v1932
      %v1965 = vmul.f32 %v1869, %v1933
      %v1966 = vmul.f32 %v1870, %v1934
      %v1967 = vmul.f32 %v1871, %v1935
      %v1968 = vmul.f32 %v1872, %v1936
      %s1969 = scalar_lea.vmem %s3, 192
      %v1970 = vld [vmem:[%s1969] sm:$0xf]
      %v1971 = vld [vmem:[%s1969 + $0x4] sm:$0xf]
      %v1972 = vld [vmem:[%s1969 + $0x8] sm:$0xf]
      %v1973 = vld [vmem:[%s1969 + $0xc] sm:$0xf]
      %v1974 = vld [vmem:[%s1969 + $0x10] sm:$0xf]
      %v1975 = vld [vmem:[%s1969 + $0x14] sm:$0xf]
      %v1976 = vld [vmem:[%s1969 + $0x18] sm:$0xf]
      %v1977 = vld [vmem:[%s1969 + $0x1c] sm:$0xf]
      %v1978 = vld [vmem:[%s1969 + $0x20] sm:$0xf]
      %v1979 = vld [vmem:[%s1969 + $0x24] sm:$0xf]
      %v1980 = vld [vmem:[%s1969 + $0x28] sm:$0xf]
      %v1981 = vld [vmem:[%s1969 + $0x2c] sm:$0xf]
      %v1982 = vld [vmem:[%s1969 + $0x30] sm:$0xf]
      %v1983 = vld [vmem:[%s1969 + $0x34] sm:$0xf]
      %v1984 = vld [vmem:[%s1969 + $0x38] sm:$0xf]
      %v1985 = vld [vmem:[%s1969 + $0x3c] sm:$0xf]
      %v1986 = vpack.c.bf16 %v1939, %v1937
      %v1987 = vpack.c.bf16 %v1940, %v1938
      %v1988 = vpack.c.bf16 %v1943, %v1941
      %v1989 = vpack.c.bf16 %v1944, %v1942
      %v1990 = vpack.c.bf16 %v1947, %v1945
      %v1991 = vpack.c.bf16 %v1948, %v1946
      %v1992 = vpack.c.bf16 %v1951, %v1949
      %v1993 = vpack.c.bf16 %v1952, %v1950
      %v1994 = vpack.c.bf16 %v1955, %v1953
      %v1995 = vpack.c.bf16 %v1956, %v1954
      %v1996 = vpack.c.bf16 %v1959, %v1957
      %v1997 = vpack.c.bf16 %v1960, %v1958
      %v1998 = vpack.c.bf16 %v1963, %v1961
      %v1999 = vpack.c.bf16 %v1964, %v1962
      %v2000 = vpack.c.bf16 %v1967, %v1965
      %v2001 = vpack.c.bf16 %v1968, %v1966
      %s2002 = scalar_lea.vmem %s4, 384
      %v2003 = vld [vmem:[%s2002] sm:$0xff]
      %v2004 = vld [vmem:[%s2002 + $0x8] sm:$0xff]
      %v2005 = vld [vmem:[%s2002 + $0x10] sm:$0xff]
      %v2006 = vld [vmem:[%s2002 + $0x18] sm:$0xff]
      %v2007 = vld [vmem:[%s2002 + $0x20] sm:$0xff]
      %v2008 = vld [vmem:[%s2002 + $0x28] sm:$0xff]
      %v2009 = vld [vmem:[%s2002 + $0x30] sm:$0xff]
      %v2010 = vld [vmem:[%s2002 + $0x38] sm:$0xff]
      %v2011 = vld [vmem:[%s2002 + $0x40] sm:$0xff]
      %v2012 = vld [vmem:[%s2002 + $0x48] sm:$0xff]
      %v2013 = vld [vmem:[%s2002 + $0x50] sm:$0xff]
      %v2014 = vld [vmem:[%s2002 + $0x58] sm:$0xff]
      %v2015 = vld [vmem:[%s2002 + $0x60] sm:$0xff]
      %v2016 = vld [vmem:[%s2002 + $0x68] sm:$0xff]
      %v2017 = vld [vmem:[%s2002 + $0x70] sm:$0xff]
      %v2018 = vld [vmem:[%s2002 + $0x78] sm:$0xff]
      %2020 = vset.pattern.permute.xlu0 0
      %2021 = vperm.xlu0 %2020, %v2003
      %v2022 = vpop.permute.xlu0 %2021
      %2025 = vset.pattern.permute.xlu0 0
      %2026 = vperm.xlu0 %2025, %v2004
      %v2027 = vpop.permute.xlu0 %2026
      %2030 = vset.pattern.permute.xlu0 0
      %2031 = vperm.xlu0 %2030, %v2005
      %v2032 = vpop.permute.xlu0 %2031
      %2035 = vset.pattern.permute.xlu0 0
      %2036 = vperm.xlu0 %2035, %v2006
      %v2037 = vpop.permute.xlu0 %2036
      %2040 = vset.pattern.permute.xlu0 0
      %2041 = vperm.xlu0 %2040, %v2007
      %v2042 = vpop.permute.xlu0 %2041
      %2045 = vset.pattern.permute.xlu0 0
      %2046 = vperm.xlu0 %2045, %v2008
      %v2047 = vpop.permute.xlu0 %2046
      %2050 = vset.pattern.permute.xlu0 0
      %2051 = vperm.xlu0 %2050, %v2009
      %v2052 = vpop.permute.xlu0 %2051
      %2055 = vset.pattern.permute.xlu0 0
      %2056 = vperm.xlu0 %2055, %v2010
      %v2057 = vpop.permute.xlu0 %2056
      %2060 = vset.pattern.permute.xlu0 0
      %2061 = vperm.xlu0 %2060, %v2011
      %v2062 = vpop.permute.xlu0 %2061
      %2065 = vset.pattern.permute.xlu0 0
      %2066 = vperm.xlu0 %2065, %v2012
      %v2067 = vpop.permute.xlu0 %2066
      %2070 = vset.pattern.permute.xlu0 0
      %2071 = vperm.xlu0 %2070, %v2013
      %v2072 = vpop.permute.xlu0 %2071
      %2075 = vset.pattern.permute.xlu0 0
      %2076 = vperm.xlu0 %2075, %v2014
      %v2077 = vpop.permute.xlu0 %2076
      %2080 = vset.pattern.permute.xlu0 0
      %2081 = vperm.xlu0 %2080, %v2015
      %v2082 = vpop.permute.xlu0 %2081
      %2085 = vset.pattern.permute.xlu0 0
      %2086 = vperm.xlu0 %2085, %v2016
      %v2087 = vpop.permute.xlu0 %2086
      %2090 = vset.pattern.permute.xlu0 0
      %2091 = vperm.xlu0 %2090, %v2017
      %v2092 = vpop.permute.xlu0 %2091
      %2095 = vset.pattern.permute.xlu0 0
      %2096 = vperm.xlu0 %2095, %v2018
      %v2097 = vpop.permute.xlu0 %2096
      %v2115 = vunpack.c.l.b16 %v1970
      %v2116 = vunpack.c.l.b16 %v1971
      %v2117 = vunpack.c.l.b16 %v1972
      %v2118 = vunpack.c.l.b16 %v1973
      %v2119 = vunpack.c.l.b16 %v1974
      %v2120 = vunpack.c.l.b16 %v1975
      %v2121 = vunpack.c.l.b16 %v1976
      %v2122 = vunpack.c.l.b16 %v1977
      %v2123 = vunpack.c.l.b16 %v1978
      %v2124 = vunpack.c.l.b16 %v1979
      %v2125 = vunpack.c.l.b16 %v1980
      %v2126 = vunpack.c.l.b16 %v1981
      %v2127 = vunpack.c.l.b16 %v1982
      %v2128 = vunpack.c.l.b16 %v1983
      %v2129 = vunpack.c.l.b16 %v1984
      %v2130 = vunpack.c.l.b16 %v1985
      %v2131 = vpack.c.b16 %v2116, %v2115
      %v2132 = vpack.c.b16 %v2118, %v2117
      %v2133 = vpack.c.b16 %v2120, %v2119
      %v2134 = vpack.c.b16 %v2122, %v2121
      %v2135 = vpack.c.b16 %v2124, %v2123
      %v2136 = vpack.c.b16 %v2126, %v2125
      %v2137 = vpack.c.b16 %v2128, %v2127
      %v2138 = vpack.c.b16 %v2130, %v2129
      %2147 = vmatprep.subr.bf16.mxu0 %v2001
      %2148 = vmatpush1.bf16.msra.mxu0 %v2000
      %2149 = vmatprep.subr.bf16.mxu0 %v1999
      %2150 = vmatpush1.bf16.msra.mxu0 %v1998
      %2151 = vmatprep.subr.bf16.mxu0 %v1997
      %2152 = vmatpush1.bf16.msra.mxu0 %v1996
      %2153 = vmatprep.subr.bf16.mxu0 %v1995
      %2154 = vmatpush1.bf16.msra.mxu0 %v1994
      %2155 = vmatprep.subr.bf16.mxu0 %v1993
      %2156 = vmatpush1.bf16.msra.mxu0 %v1992
      %2157 = vmatprep.subr.bf16.mxu0 %v1991
      %2158 = vmatpush1.bf16.msra.mxu0 %v1990
      %2159 = vmatprep.subr.bf16.mxu0 %v1989
      %2160 = vmatpush1.bf16.msra.mxu0 %v1988
      %2161 = vmatprep.subr.bf16.mxu0 %v1987
      %2162 = vmatpush1.bf16.msra.mxu0 %v1986
      %2163 = vmatprep.subr.bf16.mxu0 0
      %2164 = vmatpush2.bf16.msra.mxu0 0
      %2165 = vmatprep.subr.bf16.mxu0 0
      %2166 = vmatpush2.bf16.msra.mxu0 0
      %2167 = vmatprep.subr.bf16.mxu0 0
      %2168 = vmatpush2.bf16.msra.mxu0 0
      %2169 = vmatprep.subr.bf16.mxu0 0
      %2170 = vmatpush2.bf16.msra.mxu0 0
      %2171 = vmatprep.subr.bf16.mxu0 0
      %2172 = vmatpush2.bf16.msra.mxu0 0
      %2173 = vmatprep.subr.bf16.mxu0 0
      %2174 = vmatpush2.bf16.msra.mxu0 0
      %2175 = vmatprep.subr.bf16.mxu0 0
      %2176 = vmatpush2.bf16.msra.mxu0 0
      %2177 = vmatprep.subr.bf16.mxu0 0
      %2178 = vmatpush2.bf16.msra.mxu0 0
      %2179 = vmatprep.mubr.bf16.mxu0 0
      %2180 = vmatmul.mubr.bf16.gmra.mxu0 %v2131
      %v2181 = vpop.f32.mrf.mxu0
      %v2182 = vadd.f32 %v2022, %v2181
      %v2183 = vpop.f32.mrf.mxu0
      %v2184 = vadd.f32 %v2022, %v2183
      %v2185 = vpop.f32.mrf.mxu0
      %v2186 = vadd.f32 %v2027, %v2185
      %v2187 = vpop.f32.mrf.mxu0
      %v2188 = vadd.f32 %v2027, %v2187
      %2189 = vmatprep.mubr.bf16.mxu0 0
      %2190 = vmatmul.mubr.bf16.gmra.mxu0 %v2132
      %v2191 = vpop.f32.mrf.mxu0
      %v2192 = vadd.f32 %v2032, %v2191
      %v2193 = vpop.f32.mrf.mxu0
      %v2194 = vadd.f32 %v2032, %v2193
      %v2195 = vpop.f32.mrf.mxu0
      %v2196 = vadd.f32 %v2037, %v2195
      %v2197 = vpop.f32.mrf.mxu0
      %v2198 = vadd.f32 %v2037, %v2197
      %2199 = vmatprep.mubr.bf16.mxu0 0
      %2200 = vmatmul.mubr.bf16.gmra.mxu0 %v2133
      %v2201 = vpop.f32.mrf.mxu0
      %v2202 = vadd.f32 %v2042, %v2201
      %v2203 = vpop.f32.mrf.mxu0
      %v2204 = vadd.f32 %v2042, %v2203
      %v2205 = vpop.f32.mrf.mxu0
      %v2206 = vadd.f32 %v2047, %v2205
      %v2207 = vpop.f32.mrf.mxu0
      %v2208 = vadd.f32 %v2047, %v2207
      %2209 = vmatprep.mubr.bf16.mxu0 0
      %2210 = vmatmul.mubr.bf16.gmra.mxu0 %v2134
      %v2211 = vpop.f32.mrf.mxu0
      %v2212 = vadd.f32 %v2052, %v2211
      %v2213 = vpop.f32.mrf.mxu0
      %v2214 = vadd.f32 %v2052, %v2213
      %v2215 = vpop.f32.mrf.mxu0
      %v2216 = vadd.f32 %v2057, %v2215
      %v2217 = vpop.f32.mrf.mxu0
      %v2218 = vadd.f32 %v2057, %v2217
      %2219 = vmatprep.mubr.bf16.mxu0 0
      %2220 = vmatmul.mubr.bf16.gmra.mxu0 %v2135
      %v2221 = vpop.f32.mrf.mxu0
      %v2222 = vadd.f32 %v2062, %v2221
      %v2223 = vpop.f32.mrf.mxu0
      %v2224 = vadd.f32 %v2062, %v2223
      %v2225 = vpop.f32.mrf.mxu0
      %v2226 = vadd.f32 %v2067, %v2225
      %v2227 = vpop.f32.mrf.mxu0
      %v2228 = vadd.f32 %v2067, %v2227
      %2229 = vmatprep.mubr.bf16.mxu0 0
      %2230 = vmatmul.mubr.bf16.gmra.mxu0 %v2136
      %v2231 = vpop.f32.mrf.mxu0
      %v2232 = vadd.f32 %v2072, %v2231
      %v2233 = vpop.f32.mrf.mxu0
      %v2234 = vadd.f32 %v2072, %v2233
      %v2235 = vpop.f32.mrf.mxu0
      %v2236 = vadd.f32 %v2077, %v2235
      %v2237 = vpop.f32.mrf.mxu0
      %v2238 = vadd.f32 %v2077, %v2237
      %2239 = vmatprep.mubr.bf16.mxu0 0
      %2240 = vmatmul.mubr.bf16.gmra.mxu0 %v2137
      %v2241 = vpop.f32.mrf.mxu0
      %v2242 = vadd.f32 %v2082, %v2241
      %v2243 = vpop.f32.mrf.mxu0
      %v2244 = vadd.f32 %v2082, %v2243
      %v2245 = vpop.f32.mrf.mxu0
      %v2246 = vadd.f32 %v2087, %v2245
      %v2247 = vpop.f32.mrf.mxu0
      %v2248 = vadd.f32 %v2087, %v2247
      %2249 = vmatprep.mubr.bf16.mxu0 0
      %2250 = vmatmul.mubr.bf16.gmra.mxu0 %v2138
      %v2251 = vpop.f32.mrf.mxu0
      %v2252 = vadd.f32 %v2092, %v2251
      %v2253 = vpop.f32.mrf.mxu0
      %v2254 = vadd.f32 %v2092, %v2253
      %v2255 = vpop.f32.mrf.mxu0
      %v2256 = vadd.f32 %v2097, %v2255
      %v2257 = vpop.f32.mrf.mxu0
      %v2258 = vadd.f32 %v2097, %v2257
      %2259 = vdwg.mxu0
      %v2260 = vmul.f32 %v2182, 0.5
      %v2261 = vmul.f32 %v2184, 0.5
      %v2262 = vmul.f32 %v2186, 0.5
      %v2263 = vmul.f32 %v2188, 0.5
      %v2264 = vmul.f32 %v2192, 0.5
      %v2265 = vmul.f32 %v2194, 0.5
      %v2266 = vmul.f32 %v2196, 0.5
      %v2267 = vmul.f32 %v2198, 0.5
      %v2268 = vmul.f32 %v2202, 0.5
      %v2269 = vmul.f32 %v2204, 0.5
      %v2270 = vmul.f32 %v2206, 0.5
      %v2271 = vmul.f32 %v2208, 0.5
      %v2272 = vmul.f32 %v2212, 0.5
      %v2273 = vmul.f32 %v2214, 0.5
      %v2274 = vmul.f32 %v2216, 0.5
      %v2275 = vmul.f32 %v2218, 0.5
      %v2276 = vmul.f32 %v2222, 0.5
      %v2277 = vmul.f32 %v2224, 0.5
      %v2278 = vmul.f32 %v2226, 0.5
      %v2279 = vmul.f32 %v2228, 0.5
      %v2280 = vmul.f32 %v2232, 0.5
      %v2281 = vmul.f32 %v2234, 0.5
      %v2282 = vmul.f32 %v2236, 0.5
      %v2283 = vmul.f32 %v2238, 0.5
      %v2284 = vmul.f32 %v2242, 0.5
      %v2285 = vmul.f32 %v2244, 0.5
      %v2286 = vmul.f32 %v2246, 0.5
      %v2287 = vmul.f32 %v2248, 0.5
      %v2288 = vmul.f32 %v2252, 0.5
      %v2289 = vmul.f32 %v2254, 0.5
      %v2290 = vmul.f32 %v2256, 0.5
      %v2291 = vmul.f32 %v2258, 0.5
      %v2292 = vtanh.pop %v2260
      %v2293 = vtanh.pop %v2261
      %v2294 = vtanh.pop %v2262
      %v2295 = vtanh.pop %v2263
      %v2296 = vtanh.pop %v2264
      %v2297 = vtanh.pop %v2265
      %v2298 = vtanh.pop %v2266
      %v2299 = vtanh.pop %v2267
      %v2300 = vtanh.pop %v2268
      %v2301 = vtanh.pop %v2269
      %v2302 = vtanh.pop %v2270
      %v2303 = vtanh.pop %v2271
      %v2304 = vtanh.pop %v2272
      %v2305 = vtanh.pop %v2273
      %v2306 = vtanh.pop %v2274
      %v2307 = vtanh.pop %v2275
      %v2308 = vtanh.pop %v2276
      %v2309 = vtanh.pop %v2277
      %v2310 = vtanh.pop %v2278
      %v2311 = vtanh.pop %v2279
      %v2312 = vtanh.pop %v2280
      %v2313 = vtanh.pop %v2281
      %v2314 = vtanh.pop %v2282
      %v2315 = vtanh.pop %v2283
      %v2316 = vtanh.pop %v2284
      %v2317 = vtanh.pop %v2285
      %v2318 = vtanh.pop %v2286
      %v2319 = vtanh.pop %v2287
      %v2320 = vtanh.pop %v2288
      %v2321 = vtanh.pop %v2289
      %v2322 = vtanh.pop %v2290
      %v2323 = vtanh.pop %v2291
      %v2324 = vadd.f32 %v2292, 1.0
      %v2325 = vadd.f32 %v2293, 1.0
      %v2326 = vadd.f32 %v2294, 1.0
      %v2327 = vadd.f32 %v2295, 1.0
      %v2328 = vadd.f32 %v2296, 1.0
      %v2329 = vadd.f32 %v2297, 1.0
      %v2330 = vadd.f32 %v2298, 1.0
      %v2331 = vadd.f32 %v2299, 1.0
      %v2332 = vadd.f32 %v2300, 1.0
      %v2333 = vadd.f32 %v2301, 1.0
      %v2334 = vadd.f32 %v2302, 1.0
      %v2335 = vadd.f32 %v2303, 1.0
      %v2336 = vadd.f32 %v2304, 1.0
      %v2337 = vadd.f32 %v2305, 1.0
      %v2338 = vadd.f32 %v2306, 1.0
      %v2339 = vadd.f32 %v2307, 1.0
      %v2340 = vadd.f32 %v2308, 1.0
      %v2341 = vadd.f32 %v2309, 1.0
      %v2342 = vadd.f32 %v2310, 1.0
      %v2343 = vadd.f32 %v2311, 1.0
      %v2344 = vadd.f32 %v2312, 1.0
      %v2345 = vadd.f32 %v2313, 1.0
      %v2346 = vadd.f32 %v2314, 1.0
      %v2347 = vadd.f32 %v2315, 1.0
      %v2348 = vadd.f32 %v2316, 1.0
      %v2349 = vadd.f32 %v2317, 1.0
      %v2350 = vadd.f32 %v2318, 1.0
      %v2351 = vadd.f32 %v2319, 1.0
      %v2352 = vadd.f32 %v2320, 1.0
      %v2353 = vadd.f32 %v2321, 1.0
      %v2354 = vadd.f32 %v2322, 1.0
      %v2355 = vadd.f32 %v2323, 1.0
      %v2356 = vmul.f32 %v2260, %v2324
      %v2357 = vmul.f32 %v2261, %v2325
      %v2358 = vmul.f32 %v2262, %v2326
      %v2359 = vmul.f32 %v2263, %v2327
      %v2360 = vmul.f32 %v2264, %v2328
      %v2361 = vmul.f32 %v2265, %v2329
      %v2362 = vmul.f32 %v2266, %v2330
      %v2363 = vmul.f32 %v2267, %v2331
      %v2364 = vmul.f32 %v2268, %v2332
      %v2365 = vmul.f32 %v2269, %v2333
      %v2366 = vmul.f32 %v2270, %v2334
      %v2367 = vmul.f32 %v2271, %v2335
      %v2368 = vmul.f32 %v2272, %v2336
      %v2369 = vmul.f32 %v2273, %v2337
      %v2370 = vmul.f32 %v2274, %v2338
      %v2371 = vmul.f32 %v2275, %v2339
      %v2372 = vmul.f32 %v2276, %v2340
      %v2373 = vmul.f32 %v2277, %v2341
      %v2374 = vmul.f32 %v2278, %v2342
      %v2375 = vmul.f32 %v2279, %v2343
      %v2376 = vmul.f32 %v2280, %v2344
      %v2377 = vmul.f32 %v2281, %v2345
      %v2378 = vmul.f32 %v2282, %v2346
      %v2379 = vmul.f32 %v2283, %v2347
      %v2380 = vmul.f32 %v2284, %v2348
      %v2381 = vmul.f32 %v2285, %v2349
      %v2382 = vmul.f32 %v2286, %v2350
      %v2383 = vmul.f32 %v2287, %v2351
      %v2384 = vmul.f32 %v2288, %v2352
      %v2385 = vmul.f32 %v2289, %v2353
      %v2386 = vmul.f32 %v2290, %v2354
      %v2387 = vmul.f32 %v2291, %v2355
      %s2388 = scalar_lea.vmem %s3, 256
      %v2389 = vld [vmem:[%s2388] sm:$0xf]
      %v2390 = vld [vmem:[%s2388 + $0x4] sm:$0xf]
      %v2391 = vld [vmem:[%s2388 + $0x8] sm:$0xf]
      %v2392 = vld [vmem:[%s2388 + $0xc] sm:$0xf]
      %v2393 = vld [vmem:[%s2388 + $0x10] sm:$0xf]
      %v2394 = vld [vmem:[%s2388 + $0x14] sm:$0xf]
      %v2395 = vld [vmem:[%s2388 + $0x18] sm:$0xf]
      %v2396 = vld [vmem:[%s2388 + $0x1c] sm:$0xf]
      %v2397 = vld [vmem:[%s2388 + $0x20] sm:$0xf]
      %v2398 = vld [vmem:[%s2388 + $0x24] sm:$0xf]
      %v2399 = vld [vmem:[%s2388 + $0x28] sm:$0xf]
      %v2400 = vld [vmem:[%s2388 + $0x2c] sm:$0xf]
      %v2401 = vld [vmem:[%s2388 + $0x30] sm:$0xf]
      %v2402 = vld [vmem:[%s2388 + $0x34] sm:$0xf]
      %v2403 = vld [vmem:[%s2388 + $0x38] sm:$0xf]
      %v2404 = vld [vmem:[%s2388 + $0x3c] sm:$0xf]
      %v2405 = vpack.c.bf16 %v2358, %v2356
      %v2406 = vpack.c.bf16 %v2359, %v2357
      %v2407 = vpack.c.bf16 %v2362, %v2360
      %v2408 = vpack.c.bf16 %v2363, %v2361
      %v2409 = vpack.c.bf16 %v2366, %v2364
      %v2410 = vpack.c.bf16 %v2367, %v2365
      %v2411 = vpack.c.bf16 %v2370, %v2368
      %v2412 = vpack.c.bf16 %v2371, %v2369
      %v2413 = vpack.c.bf16 %v2374, %v2372
      %v2414 = vpack.c.bf16 %v2375, %v2373
      %v2415 = vpack.c.bf16 %v2378, %v2376
      %v2416 = vpack.c.bf16 %v2379, %v2377
      %v2417 = vpack.c.bf16 %v2382, %v2380
      %v2418 = vpack.c.bf16 %v2383, %v2381
      %v2419 = vpack.c.bf16 %v2386, %v2384
      %v2420 = vpack.c.bf16 %v2387, %v2385
      %s2421 = scalar_lea.vmem %s4, 512
      %v2422 = vld [vmem:[%s2421] sm:$0xff]
      %v2423 = vld [vmem:[%s2421 + $0x8] sm:$0xff]
      %v2424 = vld [vmem:[%s2421 + $0x10] sm:$0xff]
      %v2425 = vld [vmem:[%s2421 + $0x18] sm:$0xff]
      %v2426 = vld [vmem:[%s2421 + $0x20] sm:$0xff]
      %v2427 = vld [vmem:[%s2421 + $0x28] sm:$0xff]
      %v2428 = vld [vmem:[%s2421 + $0x30] sm:$0xff]
      %v2429 = vld [vmem:[%s2421 + $0x38] sm:$0xff]
      %v2430 = vld [vmem:[%s2421 + $0x40] sm:$0xff]
      %v2431 = vld [vmem:[%s2421 + $0x48] sm:$0xff]
      %v2432 = vld [vmem:[%s2421 + $0x50] sm:$0xff]
      %v2433 = vld [vmem:[%s2421 + $0x58] sm:$0xff]
      %v2434 = vld [vmem:[%s2421 + $0x60] sm:$0xff]
      %v2435 = vld [vmem:[%s2421 + $0x68] sm:$0xff]
      %v2436 = vld [vmem:[%s2421 + $0x70] sm:$0xff]
      %v2437 = vld [vmem:[%s2421 + $0x78] sm:$0xff]
      %2439 = vset.pattern.permute.xlu0 0
      %2440 = vperm.xlu0 %2439, %v2422
      %v2441 = vpop.permute.xlu0 %2440
      %2444 = vset.pattern.permute.xlu0 0
      %2445 = vperm.xlu0 %2444, %v2423
      %v2446 = vpop.permute.xlu0 %2445
      %2449 = vset.pattern.permute.xlu0 0
      %2450 = vperm.xlu0 %2449, %v2424
      %v2451 = vpop.permute.xlu0 %2450
      %2454 = vset.pattern.permute.xlu0 0
      %2455 = vperm.xlu0 %2454, %v2425
      %v2456 = vpop.permute.xlu0 %2455
      %2459 = vset.pattern.permute.xlu0 0
      %2460 = vperm.xlu0 %2459, %v2426
      %v2461 = vpop.permute.xlu0 %2460
      %2464 = vset.pattern.permute.xlu0 0
      %2465 = vperm.xlu0 %2464, %v2427
      %v2466 = vpop.permute.xlu0 %2465
      %2469 = vset.pattern.permute.xlu0 0
      %2470 = vperm.xlu0 %2469, %v2428
      %v2471 = vpop.permute.xlu0 %2470
      %2474 = vset.pattern.permute.xlu0 0
      %2475 = vperm.xlu0 %2474, %v2429
      %v2476 = vpop.permute.xlu0 %2475
      %2479 = vset.pattern.permute.xlu0 0
      %2480 = vperm.xlu0 %2479, %v2430
      %v2481 = vpop.permute.xlu0 %2480
      %2484 = vset.pattern.permute.xlu0 0
      %2485 = vperm.xlu0 %2484, %v2431
      %v2486 = vpop.permute.xlu0 %2485
      %2489 = vset.pattern.permute.xlu0 0
      %2490 = vperm.xlu0 %2489, %v2432
      %v2491 = vpop.permute.xlu0 %2490
      %2494 = vset.pattern.permute.xlu0 0
      %2495 = vperm.xlu0 %2494, %v2433
      %v2496 = vpop.permute.xlu0 %2495
      %2499 = vset.pattern.permute.xlu0 0
      %2500 = vperm.xlu0 %2499, %v2434
      %v2501 = vpop.permute.xlu0 %2500
      %2504 = vset.pattern.permute.xlu0 0
      %2505 = vperm.xlu0 %2504, %v2435
      %v2506 = vpop.permute.xlu0 %2505
      %2509 = vset.pattern.permute.xlu0 0
      %2510 = vperm.xlu0 %2509, %v2436
      %v2511 = vpop.permute.xlu0 %2510
      %2514 = vset.pattern.permute.xlu0 0
      %2515 = vperm.xlu0 %2514, %v2437
      %v2516 = vpop.permute.xlu0 %2515
      %v2534 = vunpack.c.l.b16 %v2389
      %v2535 = vunpack.c.l.b16 %v2390
      %v2536 = vunpack.c.l.b16 %v2391
      %v2537 = vunpack.c.l.b16 %v2392
      %v2538 = vunpack.c.l.b16 %v2393
      %v2539 = vunpack.c.l.b16 %v2394
      %v2540 = vunpack.c.l.b16 %v2395
      %v2541 = vunpack.c.l.b16 %v2396
      %v2542 = vunpack.c.l.b16 %v2397
      %v2543 = vunpack.c.l.b16 %v2398
      %v2544 = vunpack.c.l.b16 %v2399
      %v2545 = vunpack.c.l.b16 %v2400
      %v2546 = vunpack.c.l.b16 %v2401
      %v2547 = vunpack.c.l.b16 %v2402
      %v2548 = vunpack.c.l.b16 %v2403
      %v2549 = vunpack.c.l.b16 %v2404
      %v2550 = vpack.c.b16 %v2535, %v2534
      %v2551 = vpack.c.b16 %v2537, %v2536
      %v2552 = vpack.c.b16 %v2539, %v2538
      %v2553 = vpack.c.b16 %v2541, %v2540
      %v2554 = vpack.c.b16 %v2543, %v2542
      %v2555 = vpack.c.b16 %v2545, %v2544
      %v2556 = vpack.c.b16 %v2547, %v2546
      %v2557 = vpack.c.b16 %v2549, %v2548
      %2566 = vmatprep.subr.bf16.mxu0 %v2420
      %2567 = vmatpush1.bf16.msra.mxu0 %v2419
      %2568 = vmatprep.subr.bf16.mxu0 %v2418
      %2569 = vmatpush1.bf16.msra.mxu0 %v2417
      %2570 = vmatprep.subr.bf16.mxu0 %v2416
      %2571 = vmatpush1.bf16.msra.mxu0 %v2415
      %2572 = vmatprep.subr.bf16.mxu0 %v2414
      %2573 = vmatpush1.bf16.msra.mxu0 %v2413
      %2574 = vmatprep.subr.bf16.mxu0 %v2412
      %2575 = vmatpush1.bf16.msra.mxu0 %v2411
      %2576 = vmatprep.subr.bf16.mxu0 %v2410
      %2577 = vmatpush1.bf16.msra.mxu0 %v2409
      %2578 = vmatprep.subr.bf16.mxu0 %v2408
      %2579 = vmatpush1.bf16.msra.mxu0 %v2407
      %2580 = vmatprep.subr.bf16.mxu0 %v2406
      %2581 = vmatpush1.bf16.msra.mxu0 %v2405
      %2582 = vmatprep.subr.bf16.mxu0 0
      %2583 = vmatpush2.bf16.msra.mxu0 0
      %2584 = vmatprep.subr.bf16.mxu0 0
      %2585 = vmatpush2.bf16.msra.mxu0 0
      %2586 = vmatprep.subr.bf16.mxu0 0
      %2587 = vmatpush2.bf16.msra.mxu0 0
      %2588 = vmatprep.subr.bf16.mxu0 0
      %2589 = vmatpush2.bf16.msra.mxu0 0
      %2590 = vmatprep.subr.bf16.mxu0 0
      %2591 = vmatpush2.bf16.msra.mxu0 0
      %2592 = vmatprep.subr.bf16.mxu0 0
      %2593 = vmatpush2.bf16.msra.mxu0 0
      %2594 = vmatprep.subr.bf16.mxu0 0
      %2595 = vmatpush2.bf16.msra.mxu0 0
      %2596 = vmatprep.subr.bf16.mxu0 0
      %2597 = vmatpush2.bf16.msra.mxu0 0
      %2598 = vmatprep.mubr.bf16.mxu0 0
      %2599 = vmatmul.mubr.bf16.gmra.mxu0 %v2550
      %v2600 = vpop.f32.mrf.mxu0
      %v2601 = vadd.f32 %v2441, %v2600
      %v2602 = vpop.f32.mrf.mxu0
      %v2603 = vadd.f32 %v2441, %v2602
      %v2604 = vpop.f32.mrf.mxu0
      %v2605 = vadd.f32 %v2446, %v2604
      %v2606 = vpop.f32.mrf.mxu0
      %v2607 = vadd.f32 %v2446, %v2606
      %2608 = vmatprep.mubr.bf16.mxu0 0
      %2609 = vmatmul.mubr.bf16.gmra.mxu0 %v2551
      %v2610 = vpop.f32.mrf.mxu0
      %v2611 = vadd.f32 %v2451, %v2610
      %v2612 = vpop.f32.mrf.mxu0
      %v2613 = vadd.f32 %v2451, %v2612
      %v2614 = vpop.f32.mrf.mxu0
      %v2615 = vadd.f32 %v2456, %v2614
      %v2616 = vpop.f32.mrf.mxu0
      %v2617 = vadd.f32 %v2456, %v2616
      %2618 = vmatprep.mubr.bf16.mxu0 0
      %2619 = vmatmul.mubr.bf16.gmra.mxu0 %v2552
      %v2620 = vpop.f32.mrf.mxu0
      %v2621 = vadd.f32 %v2461, %v2620
      %v2622 = vpop.f32.mrf.mxu0
      %v2623 = vadd.f32 %v2461, %v2622
      %v2624 = vpop.f32.mrf.mxu0
      %v2625 = vadd.f32 %v2466, %v2624
      %v2626 = vpop.f32.mrf.mxu0
      %v2627 = vadd.f32 %v2466, %v2626
      %2628 = vmatprep.mubr.bf16.mxu0 0
      %2629 = vmatmul.mubr.bf16.gmra.mxu0 %v2553
      %v2630 = vpop.f32.mrf.mxu0
      %v2631 = vadd.f32 %v2471, %v2630
      %v2632 = vpop.f32.mrf.mxu0
      %v2633 = vadd.f32 %v2471, %v2632
      %v2634 = vpop.f32.mrf.mxu0
      %v2635 = vadd.f32 %v2476, %v2634
      %v2636 = vpop.f32.mrf.mxu0
      %v2637 = vadd.f32 %v2476, %v2636
      %2638 = vmatprep.mubr.bf16.mxu0 0
      %2639 = vmatmul.mubr.bf16.gmra.mxu0 %v2554
      %v2640 = vpop.f32.mrf.mxu0
      %v2641 = vadd.f32 %v2481, %v2640
      %v2642 = vpop.f32.mrf.mxu0
      %v2643 = vadd.f32 %v2481, %v2642
      %v2644 = vpop.f32.mrf.mxu0
      %v2645 = vadd.f32 %v2486, %v2644
      %v2646 = vpop.f32.mrf.mxu0
      %v2647 = vadd.f32 %v2486, %v2646
      %2648 = vmatprep.mubr.bf16.mxu0 0
      %2649 = vmatmul.mubr.bf16.gmra.mxu0 %v2555
      %v2650 = vpop.f32.mrf.mxu0
      %v2651 = vadd.f32 %v2491, %v2650
      %v2652 = vpop.f32.mrf.mxu0
      %v2653 = vadd.f32 %v2491, %v2652
      %v2654 = vpop.f32.mrf.mxu0
      %v2655 = vadd.f32 %v2496, %v2654
      %v2656 = vpop.f32.mrf.mxu0
      %v2657 = vadd.f32 %v2496, %v2656
      %2658 = vmatprep.mubr.bf16.mxu0 0
      %2659 = vmatmul.mubr.bf16.gmra.mxu0 %v2556
      %v2660 = vpop.f32.mrf.mxu0
      %v2661 = vadd.f32 %v2501, %v2660
      %v2662 = vpop.f32.mrf.mxu0
      %v2663 = vadd.f32 %v2501, %v2662
      %v2664 = vpop.f32.mrf.mxu0
      %v2665 = vadd.f32 %v2506, %v2664
      %v2666 = vpop.f32.mrf.mxu0
      %v2667 = vadd.f32 %v2506, %v2666
      %2668 = vmatprep.mubr.bf16.mxu0 0
      %2669 = vmatmul.mubr.bf16.gmra.mxu0 %v2557
      %v2670 = vpop.f32.mrf.mxu0
      %v2671 = vadd.f32 %v2511, %v2670
      %v2672 = vpop.f32.mrf.mxu0
      %v2673 = vadd.f32 %v2511, %v2672
      %v2674 = vpop.f32.mrf.mxu0
      %v2675 = vadd.f32 %v2516, %v2674
      %v2676 = vpop.f32.mrf.mxu0
      %v2677 = vadd.f32 %v2516, %v2676
      %2678 = vdwg.mxu0
      %v2679 = vmul.f32 %v2601, 0.5
      %v2680 = vmul.f32 %v2603, 0.5
      %v2681 = vmul.f32 %v2605, 0.5
      %v2682 = vmul.f32 %v2607, 0.5
      %v2683 = vmul.f32 %v2611, 0.5
      %v2684 = vmul.f32 %v2613, 0.5
      %v2685 = vmul.f32 %v2615, 0.5
      %v2686 = vmul.f32 %v2617, 0.5
      %v2687 = vmul.f32 %v2621, 0.5
      %v2688 = vmul.f32 %v2623, 0.5
      %v2689 = vmul.f32 %v2625, 0.5
      %v2690 = vmul.f32 %v2627, 0.5
      %v2691 = vmul.f32 %v2631, 0.5
      %v2692 = vmul.f32 %v2633, 0.5
      %v2693 = vmul.f32 %v2635, 0.5
      %v2694 = vmul.f32 %v2637, 0.5
      %v2695 = vmul.f32 %v2641, 0.5
      %v2696 = vmul.f32 %v2643, 0.5
      %v2697 = vmul.f32 %v2645, 0.5
      %v2698 = vmul.f32 %v2647, 0.5
      %v2699 = vmul.f32 %v2651, 0.5
      %v2700 = vmul.f32 %v2653, 0.5
      %v2701 = vmul.f32 %v2655, 0.5
      %v2702 = vmul.f32 %v2657, 0.5
      %v2703 = vmul.f32 %v2661, 0.5
      %v2704 = vmul.f32 %v2663, 0.5
      %v2705 = vmul.f32 %v2665, 0.5
      %v2706 = vmul.f32 %v2667, 0.5
      %v2707 = vmul.f32 %v2671, 0.5
      %v2708 = vmul.f32 %v2673, 0.5
      %v2709 = vmul.f32 %v2675, 0.5
      %v2710 = vmul.f32 %v2677, 0.5
      %v2711 = vtanh.pop %v2679
      %v2712 = vtanh.pop %v2680
      %v2713 = vtanh.pop %v2681
      %v2714 = vtanh.pop %v2682
      %v2715 = vtanh.pop %v2683
      %v2716 = vtanh.pop %v2684
      %v2717 = vtanh.pop %v2685
      %v2718 = vtanh.pop %v2686
      %v2719 = vtanh.pop %v2687
      %v2720 = vtanh.pop %v2688
      %v2721 = vtanh.pop %v2689
      %v2722 = vtanh.pop %v2690
      %v2723 = vtanh.pop %v2691
      %v2724 = vtanh.pop %v2692
      %v2725 = vtanh.pop %v2693
      %v2726 = vtanh.pop %v2694
      %v2727 = vtanh.pop %v2695
      %v2728 = vtanh.pop %v2696
      %v2729 = vtanh.pop %v2697
      %v2730 = vtanh.pop %v2698
      %v2731 = vtanh.pop %v2699
      %v2732 = vtanh.pop %v2700
      %v2733 = vtanh.pop %v2701
      %v2734 = vtanh.pop %v2702
      %v2735 = vtanh.pop %v2703
      %v2736 = vtanh.pop %v2704
      %v2737 = vtanh.pop %v2705
      %v2738 = vtanh.pop %v2706
      %v2739 = vtanh.pop %v2707
      %v2740 = vtanh.pop %v2708
      %v2741 = vtanh.pop %v2709
      %v2742 = vtanh.pop %v2710
      %v2743 = vadd.f32 %v2711, 1.0
      %v2744 = vadd.f32 %v2712, 1.0
      %v2745 = vadd.f32 %v2713, 1.0
      %v2746 = vadd.f32 %v2714, 1.0
      %v2747 = vadd.f32 %v2715, 1.0
      %v2748 = vadd.f32 %v2716, 1.0
      %v2749 = vadd.f32 %v2717, 1.0
      %v2750 = vadd.f32 %v2718, 1.0
      %v2751 = vadd.f32 %v2719, 1.0
      %v2752 = vadd.f32 %v2720, 1.0
      %v2753 = vadd.f32 %v2721, 1.0
      %v2754 = vadd.f32 %v2722, 1.0
      %v2755 = vadd.f32 %v2723, 1.0
      %v2756 = vadd.f32 %v2724, 1.0
      %v2757 = vadd.f32 %v2725, 1.0
      %v2758 = vadd.f32 %v2726, 1.0
      %v2759 = vadd.f32 %v2727, 1.0
      %v2760 = vadd.f32 %v2728, 1.0
      %v2761 = vadd.f32 %v2729, 1.0
      %v2762 = vadd.f32 %v2730, 1.0
      %v2763 = vadd.f32 %v2731, 1.0
      %v2764 = vadd.f32 %v2732, 1.0
      %v2765 = vadd.f32 %v2733, 1.0
      %v2766 = vadd.f32 %v2734, 1.0
      %v2767 = vadd.f32 %v2735, 1.0
      %v2768 = vadd.f32 %v2736, 1.0
      %v2769 = vadd.f32 %v2737, 1.0
      %v2770 = vadd.f32 %v2738, 1.0
      %v2771 = vadd.f32 %v2739, 1.0
      %v2772 = vadd.f32 %v2740, 1.0
      %v2773 = vadd.f32 %v2741, 1.0
      %v2774 = vadd.f32 %v2742, 1.0
      %v2775 = vmul.f32 %v2679, %v2743
      %v2776 = vmul.f32 %v2680, %v2744
      %v2777 = vmul.f32 %v2681, %v2745
      %v2778 = vmul.f32 %v2682, %v2746
      %v2779 = vmul.f32 %v2683, %v2747
      %v2780 = vmul.f32 %v2684, %v2748
      %v2781 = vmul.f32 %v2685, %v2749
      %v2782 = vmul.f32 %v2686, %v2750
      %v2783 = vmul.f32 %v2687, %v2751
      %v2784 = vmul.f32 %v2688, %v2752
      %v2785 = vmul.f32 %v2689, %v2753
      %v2786 = vmul.f32 %v2690, %v2754
      %v2787 = vmul.f32 %v2691, %v2755
      %v2788 = vmul.f32 %v2692, %v2756
      %v2789 = vmul.f32 %v2693, %v2757
      %v2790 = vmul.f32 %v2694, %v2758
      %v2791 = vmul.f32 %v2695, %v2759
      %v2792 = vmul.f32 %v2696, %v2760
      %v2793 = vmul.f32 %v2697, %v2761
      %v2794 = vmul.f32 %v2698, %v2762
      %v2795 = vmul.f32 %v2699, %v2763
      %v2796 = vmul.f32 %v2700, %v2764
      %v2797 = vmul.f32 %v2701, %v2765
      %v2798 = vmul.f32 %v2702, %v2766
      %v2799 = vmul.f32 %v2703, %v2767
      %v2800 = vmul.f32 %v2704, %v2768
      %v2801 = vmul.f32 %v2705, %v2769
      %v2802 = vmul.f32 %v2706, %v2770
      %v2803 = vmul.f32 %v2707, %v2771
      %v2804 = vmul.f32 %v2708, %v2772
      %v2805 = vmul.f32 %v2709, %v2773
      %v2806 = vmul.f32 %v2710, %v2774
      %v2807 = vld [vmem:[%s5] sm:$0xf]
      %v2808 = vpack.c.bf16 %v2777, %v2775
      %v2809 = vpack.c.bf16 %v2778, %v2776
      %v2810 = vpack.c.bf16 %v2781, %v2779
      %v2811 = vpack.c.bf16 %v2782, %v2780
      %v2812 = vpack.c.bf16 %v2785, %v2783
      %v2813 = vpack.c.bf16 %v2786, %v2784
      %v2814 = vpack.c.bf16 %v2789, %v2787
      %v2815 = vpack.c.bf16 %v2790, %v2788
      %v2816 = vpack.c.bf16 %v2793, %v2791
      %v2817 = vpack.c.bf16 %v2794, %v2792
      %v2818 = vpack.c.bf16 %v2797, %v2795
      %v2819 = vpack.c.bf16 %v2798, %v2796
      %v2820 = vpack.c.bf16 %v2801, %v2799
      %v2821 = vpack.c.bf16 %v2802, %v2800
      %v2822 = vpack.c.bf16 %v2805, %v2803
      %v2823 = vpack.c.bf16 %v2806, %v2804
      %v2824 = vld [vmem:[%s6] sm:$0xff]
      %2826 = vset.pattern.permute.xlu0 0
      %2827 = vperm.xlu0 %2826, %v2824
      %v2828 = vpop.permute.xlu0 %2827
      %2830 = vmatprep.subr.bf16.mxu0 %v2823
      %2831 = vmatpush1.bf16.msra.mxu0 %v2822
      %2832 = vmatprep.subr.bf16.mxu0 %v2821
      %2833 = vmatpush1.bf16.msra.mxu0 %v2820
      %2834 = vmatprep.subr.bf16.mxu0 %v2819
      %2835 = vmatpush1.bf16.msra.mxu0 %v2818
      %2836 = vmatprep.subr.bf16.mxu0 %v2817
      %2837 = vmatpush1.bf16.msra.mxu0 %v2816
      %2838 = vmatprep.subr.bf16.mxu0 %v2815
      %2839 = vmatpush1.bf16.msra.mxu0 %v2814
      %2840 = vmatprep.subr.bf16.mxu0 %v2813
      %2841 = vmatpush1.bf16.msra.mxu0 %v2812
      %2842 = vmatprep.subr.bf16.mxu0 %v2811
      %2843 = vmatpush1.bf16.msra.mxu0 %v2810
      %2844 = vmatprep.subr.bf16.mxu0 %v2809
      %2845 = vmatpush1.bf16.msra.mxu0 %v2808
      %2846 = vmatprep.subr.bf16.mxu0 0
      %2847 = vmatpush2.bf16.msra.mxu0 0
      %2848 = vmatprep.subr.bf16.mxu0 0
      %2849 = vmatpush2.bf16.msra.mxu0 0
      %2850 = vmatprep.subr.bf16.mxu0 0
      %2851 = vmatpush2.bf16.msra.mxu0 0
      %2852 = vmatprep.subr.bf16.mxu0 0
      %2853 = vmatpush2.bf16.msra.mxu0 0
      %2854 = vmatprep.subr.bf16.mxu0 0
      %2855 = vmatpush2.bf16.msra.mxu0 0
      %2856 = vmatprep.subr.bf16.mxu0 0
      %2857 = vmatpush2.bf16.msra.mxu0 0
      %2858 = vmatprep.subr.bf16.mxu0 0
      %2859 = vmatpush2.bf16.msra.mxu0 0
      %2860 = vmatprep.subr.bf16.mxu0 0
      %2861 = vmatpush2.bf16.msra.mxu0 0
      %2862 = vmatprep.mubr.bf16.mxu0 0
      %2863 = vmatmul.mubr.bf16.gmra.mxu0 %v2807
      %v2864 = vpop.f32.mrf.mxu0
      %v2865 = vadd.f32 %v2828, %v2864
      %v2866 = vpop.f32.mrf.mxu0
      %v2867 = vadd.f32 %v2828, %v2866
      %v2868 = vpop.f32.mrf.mxu0
      %v2869 = vpop.f32.mrf.mxu0
      %2870 = vdwg.mxu0
      %2871 = vst [vmem:[%s280] sm:$0xff] %v2865
      %2872 = vst [vmem:[%s280 + $0x8] sm:$0xff] %v2867
      %s2873 = smul.u32 2, %s18
      %p2874 = scmp.lt.s32.totalorder %s2873, 3
      %s2875 = scalar_select %p2874, %s2873, 3
      %s2876 = smul.addr %s2875, 8
      %s2877 = scalar_lea.vmem %s7, %s2876
      // Predicated region
      $region49: #{ffn_forward.1} parent=47 // pred_check
        %p2878 = pneg %p188
      $region50: #{ffn_forward.1} parent=47 // pred_check_branch
        %2880 = sbr.rel (%p2878) target = $region52
      $region51: #{ffn_forward.1} parent=47 // pred_region
        %s2881 = smul.u32 2, %s18
      $region52: #{ffn_forward.1} parent=47 // pred_fallthru
        _
    $region48: #{ffn_forward.1} parent=5 // pred_fallthru
      _
    %p2882 = scmp.le.s32.totalorder 2, %s13
    // Predicated region
    $region53: #{ffn_forward.1} parent=5 // pred_check
      %p2883 = pneg %p2882
    $region54: #{ffn_forward.1} parent=5 // pred_check_branch
      %2885 = sbr.rel (%p2883) target = $region56
    $region55: #{ffn_forward.1} parent=5 // pred_region
      %s2886 = ssub.s32 %s13, 2
      // Predicated region
      $region57: #{ffn_forward.1} parent=55 // pred_check
        %p2887 = pneg %p194
      $region58: #{ffn_forward.1} parent=55 // pred_check_branch
        %2889 = sbr.rel (%p2887) target = $region60
      $region59: #{ffn_forward.1} parent=55 // pred_region
        %s2890 = smul.u32 2, %s19
        %p2891 = scmp.lt.s32.totalorder %s2890, 3
        %s2892 = scalar_select %p2891, %s2890, 3
        %s2893 = smul.addr %s2892, 8
        %s2894 = scalar_lea.vmem %s7, %s2893
      $region60: #{ffn_forward.1} parent=55 // pred_fallthru
        _
    $region56: #{ffn_forward.1} parent=5 // pred_fallthru
      _
  $region6: #{ffn_forward.1} parent=0 // loop_footer
    %s17 = sadd.s32 1, %s13
  $region7: #{ffn_forward.1} parent=0 // loop_footer_branch
    %12 = sbr.rel target = $region3
  $region8: #{ffn_forward.1} parent=0 // loop_exit
    _

</llo_original>
